<compile_context>
chip_gen: v7x
topology: tpu7x:2x2x1
jax: 0.10.0
libtpu: 0.0.40
codegen_flags: <defaults>
</compile_context>

<pallas_src>
import functools

import jax
import jax.numpy as jnp
from jax.experimental import pallas as pl
from jax.experimental.pallas import tpu as pltpu

# Logical (PyTorch) dims and their lane-padded counterparts.
D_IN = 784
H1, H1P = 300, 384
H2, H2P = 100, 128
D_OUT, D_OUTP = 10, 128

_TB_MAX = 1024            # per-step batch tile cap (safe on v5e/v6e/v7x)
_MEGACORE_MIN_BATCH = 64  # once B >= this, force >= 2 grid steps (v7x 2 TCs)


def _mlp_kernel(x_ref, w1_ref, b1_ref, w2_ref, b2_ref, w3_ref, b3_ref, o_ref):
    # In-kernel f32 -> bf16 cast of the activation tile (hides under the MXU).
    x = x_ref[...].astype(jnp.bfloat16)
    # fc1 + ReLU: bf16 MXU matmul, f32 accumulate, fused epilogue -> bf16.
    h1 = jnp.dot(x, w1_ref[...], preferred_element_type=jnp.float32)
    h1 = jnp.maximum(h1 + b1_ref[...], 0.0).astype(jnp.bfloat16)
    # fc2 + ReLU.
    h2 = jnp.dot(h1, w2_ref[...], preferred_element_type=jnp.float32)
    h2 = jnp.maximum(h2 + b2_ref[...], 0.0).astype(jnp.bfloat16)
    # fc3 (no activation) -> lane-dense 128-wide f32 output block.
    out = jnp.dot(h2, w3_ref[...], preferred_element_type=jnp.float32)
    o_ref[...] = (out + b3_ref[...]).astype(o_ref.dtype)


def _choose_batch_tile(batch):
    """Balanced batch tile: <= _TB_MAX, multiple of 16, >=2 steps for big B."""
    n_tiles = pl.cdiv(batch, _TB_MAX)
    if batch >= _MEGACORE_MIN_BATCH:
        n_tiles = max(n_tiles, 2)          # let v7x's second TC get a tile
    tb = pl.cdiv(batch, n_tiles)
    tb = max(16, ((tb + 15) // 16) * 16)   # (16,128)/(8,128) tiling safe
    return min(tb, max(16, ((batch + 15) // 16) * 16))


@functools.partial(jax.jit, static_argnames=("tb",))
def _forward_padded(x_pad, w1, b1, w2, b2, w3, b3, *, tb):
    b_pad = x_pad.shape[0]
    grid = (b_pad // tb,)

    const = lambda i: (0, 0)  # resident weights / biases
    in_specs = [
        pl.BlockSpec((tb, D_IN), lambda i: (i, 0)),   # x tile (pipelined, f32)
        pl.BlockSpec((D_IN, H1P), const),             # W1 (bf16)
        pl.BlockSpec((1, H1P), const),                # b1 (f32)
        pl.BlockSpec((H1P, H2P), const),              # W2
        pl.BlockSpec((1, H2P), const),                # b2
        pl.BlockSpec((H2P, D_OUTP), const),           # W3
        pl.BlockSpec((1, D_OUTP), const),             # b3
    ]
    out_spec = pl.BlockSpec((tb, D_OUTP), lambda i: (i, 0))

    cost = pl.CostEstimate(
        flops=2 * b_pad * (D_IN * H1 + H1 * H2 + H2 * D_OUT),
        transcendentals=0,
        bytes_accessed=(w1.size + w2.size + w3.size) * 2
        + (b1.size + b2.size + b3.size) * 4
        + b_pad * (D_IN * 4 + D_OUTP * 4),
    )

    return pl.pallas_call(
        _mlp_kernel,
        out_shape=jax.ShapeDtypeStruct((b_pad, D_OUTP), jnp.float32),
        grid=grid,
        in_specs=in_specs,
        out_specs=out_spec,
        compiler_params=pltpu.CompilerParams(
            dimension_semantics=("parallel",),
            vmem_limit_bytes=32 * 1024 * 1024,
        ),
        cost_estimate=cost,
    )(x_pad, w1, b1, w2, b2, w3, b3)


def simple_deep_rectifier_net(x, padded_params):
    """Forward pass. x: (B, ...) flattened to (B, 784). Returns (B, 10) f32 logits."""
    w1, b1, w2, b2, w3, b3 = padded_params
    B = x.shape[0]
    x2d = x.reshape(B, -1).astype(jnp.float32)   # no wrapper-side bf16 round-trip
    assert x2d.shape[1] == D_IN, f"expected {D_IN} features, got {x2d.shape[1]}"

    tb = _choose_batch_tile(B)
    b_pad = pl.cdiv(B, tb) * tb
    if b_pad != B:
        x2d = jnp.pad(x2d, ((0, b_pad - B), (0, 0)))

    out = _forward_padded(x2d, w1, b1, w2, b2, w3, b3, tb=tb)
    return out[:B, :D_OUT]


def _xavier_uniform(key, fan_in, fan_out):
    # Matches torch.nn.init.xavier_uniform_: U(-a, a), a = sqrt(6/(fan_in+fan_out)).
    # Stored as (fan_in, fan_out) so the kernel computes x @ W.
    bound = (6.0 / (fan_in + fan_out)) ** 0.5
    return jax.random.uniform(
        key, (fan_in, fan_out), dtype=jnp.float32, minval=-bound, maxval=bound
    )


def init_params(key):
    """Logical (unpadded) f32 parameters, matching the PyTorch module."""
    k1, k2, k3 = jax.random.split(key, 3)
    w1 = _xavier_uniform(k1, D_IN, H1)
    b1 = jnp.zeros((H1,), jnp.float32)
    w2 = _xavier_uniform(k2, H1, H2)
    b2 = jnp.zeros((H2,), jnp.float32)
    w3 = _xavier_uniform(k3, H2, D_OUT)
    b3 = jnp.zeros((D_OUT,), jnp.float32)
    return (w1, b1, w2, b2, w3, b3)


def pad_params(params):
    """Zero-pad to lane-aligned shapes; weights bf16, biases (1, pad) f32."""
    w1, b1, w2, b2, w3, b3 = params

    def pad2(w, rows, cols):
        return jnp.pad(w, ((0, rows - w.shape[0]), (0, cols - w.shape[1])))

    def pad1(b, cols):
        return jnp.pad(b, (0, cols - b.shape[0])).reshape(1, cols)

    w1p = pad2(w1, D_IN, H1P).astype(jnp.bfloat16)
    w2p = pad2(w2, H1P, H2P).astype(jnp.bfloat16)
    w3p = pad2(w3, H2P, D_OUTP).astype(jnp.bfloat16)
    b1p = pad1(b1, H1P).astype(jnp.float32)
    b2p = pad1(b2, H2P).astype(jnp.float32)
    b3p = pad1(b3, D_OUTP).astype(jnp.float32)
    return (w1p, b1p, w2p, b2p, w3p, b3p)


def _reference(x, params):
    """Pure-JAX reference using the same bf16 weights / f32 accumulation."""
    w1, b1, w2, b2, w3, b3 = params
    xf = x.reshape(x.shape[0], -1).astype(jnp.float32).astype(jnp.bfloat16)
    h = jnp.dot(xf, w1.astype(jnp.bfloat16), preferred_element_type=jnp.float32)
    h = jnp.maximum(h + b1, 0.0).astype(jnp.bfloat16)
    h = jnp.dot(h, w2.astype(jnp.bfloat16), preferred_element_type=jnp.float32)
    h = jnp.maximum(h + b2, 0.0).astype(jnp.bfloat16)
    h = jnp.dot(h, w3.astype(jnp.bfloat16), preferred_element_type=jnp.float32)
    return h + b3


if __name__ == "__main__":
    key = jax.random.PRNGKey(0)
    pkey, xkey1, xkey2 = jax.random.split(key, 3)
    params = init_params(pkey)
    kparams = pad_params(params)

    # Small MNIST-shaped input (NCHW); the forward flattens it to (B, 784).
    x_small = jax.random.normal(xkey1, (8, 1, 28, 28), dtype=jnp.float32)
    out_small = jax.block_until_ready(simple_deep_rectifier_net(x_small, kparams))
    assert out_small.shape == (8, 10)
    ref_small = _reference(x_small, params)
    assert jnp.allclose(out_small, ref_small, atol=2e-2, rtol=2e-2), "mismatch (B=8)"

    # Batch that exercises the multi-step grid + batch padding path (grid=(2,)).
    x_multi = jax.random.normal(xkey2, (72, 1, 28, 28), dtype=jnp.float32)
    out_multi = jax.block_until_ready(simple_deep_rectifier_net(x_multi, kparams))
    assert out_multi.shape == (72, 10)
    ref_multi = _reference(x_multi, params)
    assert jnp.allclose(out_multi, ref_multi, atol=2e-2, rtol=2e-2), "mismatch (B=72)"

    print("KERNEL_OK")
</pallas_src>

<mosaic_0001>
module attributes {stable_mosaic.version = 11 : i64} {
  func.func @_mlp_kernel(%arg0: i32, %arg1: memref<16x784xf32, #tpu.memory_space<vmem>>, %arg2: memref<784x384xbf16, #tpu.memory_space<vmem>>, %arg3: memref<1x384xf32, #tpu.memory_space<vmem>>, %arg4: memref<384x128xbf16, #tpu.memory_space<vmem>>, %arg5: memref<1x128xf32, #tpu.memory_space<vmem>>, %arg6: memref<128x128xbf16, #tpu.memory_space<vmem>>, %arg7: memref<1x128xf32, #tpu.memory_space<vmem>>, %arg8: memref<16x128xf32, #tpu.memory_space<vmem>>) attributes {dimension_semantics = [#tpu.dimension_semantics<parallel>], iteration_bounds = array<i64: 1>, scalar_prefetch = 0 : i64, scratch_operands = 0 : i64, tpu.core_type = #tpu.core_type<tc>, window_params = [{transform_indices = @transform_0, window_bounds = array<i64: 16, 784>}, {pipeline_mode = #tpu.pipeline_mode<synchronous>, transform_indices = @transform_1, window_bounds = array<i64: 784, 384>}, {pipeline_mode = #tpu.pipeline_mode<synchronous>, transform_indices = @transform_2, window_bounds = array<i64: 1, 384>}, {pipeline_mode = #tpu.pipeline_mode<synchronous>, transform_indices = @transform_3, window_bounds = array<i64: 384, 128>}, {pipeline_mode = #tpu.pipeline_mode<synchronous>, transform_indices = @transform_4, window_bounds = array<i64: 1, 128>}, {pipeline_mode = #tpu.pipeline_mode<synchronous>, transform_indices = @transform_5, window_bounds = array<i64: 128, 128>}, {pipeline_mode = #tpu.pipeline_mode<synchronous>, transform_indices = @transform_6, window_bounds = array<i64: 1, 128>}, {transform_indices = @transform_7, window_bounds = array<i64: 16, 128>}]} {
    %c0 = arith.constant 0 : index
    %c0_0 = arith.constant 0 : index
    %0 = vector.load %arg1[%c0, %c0_0] : memref<16x784xf32, #tpu.memory_space<vmem>>, vector<16x784xf32>
    %1 = arith.truncf %0 : vector<16x784xf32> to vector<16x784xbf16>
    %c0_1 = arith.constant 0 : index
    %c0_2 = arith.constant 0 : index
    %2 = vector.load %arg2[%c0_1, %c0_2] : memref<784x384xbf16, #tpu.memory_space<vmem>>, vector<784x384xbf16>
    %cst = arith.constant dense<0.000000e+00> : vector<16x384xf32>
    %3 = tpu.matmul %1, %2, %cst {dimension_numbers = #tpu.dot_dimension_numbers<[1], [0], [0], [1], [0, 0, 1, 1], [], []>} : vector<16x784xbf16>, vector<784x384xbf16>, vector<16x384xf32> -> vector<16x384xf32>
    %c0_3 = arith.constant 0 : index
    %c0_4 = arith.constant 0 : index
    %4 = vector.load %arg3[%c0_3, %c0_4] : memref<1x384xf32, #tpu.memory_space<vmem>>, vector<1x384xf32>
    %5 = vector.broadcast %4 : vector<1x384xf32> to vector<16x384xf32>
    %6 = arith.addf %3, %5 : vector<16x384xf32>
    %cst_5 = arith.constant 0.000000e+00 : f32
    %7 = vector.broadcast %cst_5 : f32 to vector<16x384xf32>
    %8 = arith.maximumf %6, %7 : vector<16x384xf32>
    %9 = arith.truncf %8 : vector<16x384xf32> to vector<16x384xbf16>
    %c0_6 = arith.constant 0 : index
    %c0_7 = arith.constant 0 : index
    %10 = vector.load %arg4[%c0_6, %c0_7] : memref<384x128xbf16, #tpu.memory_space<vmem>>, vector<384x128xbf16>
    %cst_8 = arith.constant dense<0.000000e+00> : vector<16x128xf32>
    %11 = tpu.matmul %9, %10, %cst_8 {dimension_numbers = #tpu.dot_dimension_numbers<[1], [0], [0], [1], [0, 0, 1, 1], [], []>} : vector<16x384xbf16>, vector<384x128xbf16>, vector<16x128xf32> -> vector<16x128xf32>
    %c0_9 = arith.constant 0 : index
    %c0_10 = arith.constant 0 : index
    %12 = vector.load %arg5[%c0_9, %c0_10] : memref<1x128xf32, #tpu.memory_space<vmem>>, vector<1x128xf32>
    %13 = vector.broadcast %12 : vector<1x128xf32> to vector<16x128xf32>
    %14 = arith.addf %11, %13 : vector<16x128xf32>
    %cst_11 = arith.constant 0.000000e+00 : f32
    %15 = vector.broadcast %cst_11 : f32 to vector<16x128xf32>
    %16 = arith.maximumf %14, %15 : vector<16x128xf32>
    %17 = arith.truncf %16 : vector<16x128xf32> to vector<16x128xbf16>
    %c0_12 = arith.constant 0 : index
    %c0_13 = arith.constant 0 : index
    %18 = vector.load %arg6[%c0_12, %c0_13] : memref<128x128xbf16, #tpu.memory_space<vmem>>, vector<128x128xbf16>
    %cst_14 = arith.constant dense<0.000000e+00> : vector<16x128xf32>
    %19 = tpu.matmul %17, %18, %cst_14 {dimension_numbers = #tpu.dot_dimension_numbers<[1], [0], [0], [1], [0, 0, 1, 1], [], []>} : vector<16x128xbf16>, vector<128x128xbf16>, vector<16x128xf32> -> vector<16x128xf32>
    %c0_15 = arith.constant 0 : index
    %c0_16 = arith.constant 0 : index
    %20 = vector.load %arg7[%c0_15, %c0_16] : memref<1x128xf32, #tpu.memory_space<vmem>>, vector<1x128xf32>
    %21 = vector.broadcast %20 : vector<1x128xf32> to vector<16x128xf32>
    %22 = arith.addf %19, %21 : vector<16x128xf32>
    %c0_17 = arith.constant 0 : index
    %c0_18 = arith.constant 0 : index
    %23 = vector.load %arg8[%c0_17, %c0_18] : memref<16x128xf32, #tpu.memory_space<vmem>>, vector<16x128xf32>
    tpu.vector_store %arg8[%c0_17, %c0_18], %22 {strides = array<i32>} : memref<16x128xf32, #tpu.memory_space<vmem>>, vector<16x128xf32>,
    return
  }
  func.func @transform_0(%arg0: i32) -> (i32, i32) {
    %c0_i32 = arith.constant 0 : i32
    %c0_i32_0 = arith.constant 0 : i32
    return %arg0, %c0_i32 : i32, i32
  }
  func.func @transform_1(%arg0: i32) -> (i32, i32) {
    %c0_i32 = arith.constant 0 : i32
    %c0_i32_0 = arith.constant 0 : i32
    %c0_i32_1 = arith.constant 0 : i32
    return %c0_i32, %c0_i32_0 : i32, i32
  }
  func.func @transform_2(%arg0: i32) -> (i32, i32) {
    %c0_i32 = arith.constant 0 : i32
    %c0_i32_0 = arith.constant 0 : i32
    %c0_i32_1 = arith.constant 0 : i32
    return %c0_i32, %c0_i32_0 : i32, i32
  }
  func.func @transform_3(%arg0: i32) -> (i32, i32) {
    %c0_i32 = arith.constant 0 : i32
    %c0_i32_0 = arith.constant 0 : i32
    %c0_i32_1 = arith.constant 0 : i32
    return %c0_i32, %c0_i32_0 : i32, i32
  }
  func.func @transform_4(%arg0: i32) -> (i32, i32) {
    %c0_i32 = arith.constant 0 : i32
    %c0_i32_0 = arith.constant 0 : i32
    %c0_i32_1 = arith.constant 0 : i32
    return %c0_i32, %c0_i32_0 : i32, i32
  }
  func.func @transform_5(%arg0: i32) -> (i32, i32) {
    %c0_i32 = arith.constant 0 : i32
    %c0_i32_0 = arith.constant 0 : i32
    %c0_i32_1 = arith.constant 0 : i32
    return %c0_i32, %c0_i32_0 : i32, i32
  }
  func.func @transform_6(%arg0: i32) -> (i32, i32) {
    %c0_i32 = arith.constant 0 : i32
    %c0_i32_0 = arith.constant 0 : i32
    %c0_i32_1 = arith.constant 0 : i32
    return %c0_i32, %c0_i32_0 : i32, i32
  }
  func.func @transform_7(%arg0: i32) -> (i32, i32) {
    %c0_i32 = arith.constant 0 : i32
    %c0_i32_0 = arith.constant 0 : i32
    return %arg0, %c0_i32 : i32, i32
  }
}

</mosaic_0001>

<llo_original>
// kernel: _forward_padded.1
$region0: #{_forward_padded.1}
  #allocation0 [shape = 'u32[]', space=smem, size = 0x4, offset = 0x4, fixed_abs, tag = 'smem constant byte address 0x4 - core index']
  #allocation1 [shape = 'u32[144,128]{1,0:T(1,128)}', space=vmem, size = 0x12000, scoped, tag = 'internal scratch']
  %s0 = inlined_call_operand.hbm [shape: f32[16,784], index: 0, kind: input, shape index: {}]
  %s1 = inlined_call_operand.hbm [shape: bf16[784,384], index: 1, kind: input, shape index: {}]
  %s2 = inlined_call_operand.vmem [shape: f32[1,384], index: 2, kind: input, shape index: {}]
  %s3 = inlined_call_operand.hbm [shape: bf16[384,128], index: 3, kind: input, shape index: {}]
  %s4 = inlined_call_operand.vmem [shape: f32[1,128], index: 4, kind: input, shape index: {}]
  %s5 = inlined_call_operand.hbm [shape: bf16[128,128], index: 5, kind: input, shape index: {}]
  %s6 = inlined_call_operand.vmem [shape: f32[1,128], index: 6, kind: input, shape index: {}]
  %s7 = inlined_call_operand.hbm [shape: f32[16,128], index: 7, kind: output, shape index: {}]
  %s8 = sld [smem:[#allocation0]]
  $region54: #{_forward_padded.1} parent=0
    _
  %s10 = ssub.s32 1, %s8
  %s11 = scalar_select 0, %s10, %s8
  $region1: #{_forward_padded.1} parent=0
    #allocation2 [shape = 'u8[57344]{0}', space=vmem, size = 0xe000, scoped, tag = 'input window, operand 0, single buffered']
    #allocation3 [shape = 's32[1]{0}', space=sflag, size = 0x4, scoped, tag = 'scoped memory for _forward_padded.1']
    #allocation4 [shape = 's32[1]{0}', space=sflag, size = 0x4, scoped, tag = 'scoped memory for _forward_padded.1']
    #allocation5 [shape = 'u8[602112]{0}', space=vmem, size = 0x93000, scoped, tag = 'input window, operand 1, single buffered']
    #allocation6 [shape = 's32[1]{0}', space=sflag, size = 0x4, scoped, tag = 'scoped memory for _forward_padded.1']
    #allocation7 [shape = 'u8[98304]{0}', space=vmem, size = 0x18000, scoped, tag = 'input window, operand 3, single buffered']
    #allocation8 [shape = 'u8[32768]{0}', space=vmem, size = 0x8000, scoped, tag = 'input window, operand 5, single buffered']
    #allocation9 [shape = 's32[1]{0}', space=sflag, size = 0x4, scoped, tag = 'scoped memory for _forward_padded.1']
    #allocation10 [shape = 'u8[8192]{0}', space=vmem, size = 0x2000, scoped, tag = 'output window, operand 0, single buffered']
    %12 = vsyncpa [#allocation3], 0
    %13 = vsyncpa [#allocation6], 0
    %14 = vsyncpa [#allocation9], 0
    %15 = vsyncpa [#allocation4], 0
    // Predicated region
    $region2: #{_forward_padded.1} parent=1 // pred_check
      _
    $region3: #{_forward_padded.1} parent=1 // pred_check_branch
      %17 = sbr.rel (0) target = $region5
    $region4: #{_forward_padded.1} parent=1 // pred_region
      %s19 = ssub.s32 1792, 1792
      %20 = vsyncadd [#allocation3], %s19
      %s21 = sshll.u32 [#allocation2], 4
      %s22 = int_to_ptr.vmem [resolvable:$true] %s21
      %27 = dma.hbm_to_vmem [thread:$0]  %s0, 1792, %s22, [#allocation3], 896, 896, 56
    $region5: #{_forward_padded.1} parent=1 // pred_fallthru
      _
    // Predicated region
    $region6: #{_forward_padded.1} parent=1 // pred_check
      _
    $region7: #{_forward_padded.1} parent=1 // pred_check_branch
      %29 = sbr.rel (0) target = $region9
    $region8: #{_forward_padded.1} parent=1 // pred_region
      %s31 = ssub.s32 18816, 18816
      %32 = vsyncadd [#allocation6], %s31
      %s33 = sshll.u32 [#allocation5], 4
      %s34 = int_to_ptr.vmem [resolvable:$true] %s33
      %39 = dma.hbm_to_vmem [thread:$0]  %s1, 18816, %s34, [#allocation6], 192, 192, 12
    $region9: #{_forward_padded.1} parent=1 // pred_fallthru
      _
    // Predicated region
    $region10: #{_forward_padded.1} parent=1 // pred_check
      _
    $region11: #{_forward_padded.1} parent=1 // pred_check_branch
      %41 = sbr.rel (0) target = $region13
    $region12: #{_forward_padded.1} parent=1 // pred_region
      _
    $region13: #{_forward_padded.1} parent=1 // pred_fallthru
      _
    // Predicated region
    $region14: #{_forward_padded.1} parent=1 // pred_check
      _
    $region15: #{_forward_padded.1} parent=1 // pred_check_branch
      %43 = sbr.rel (0) target = $region17
    $region16: #{_forward_padded.1} parent=1 // pred_region
      %s45 = ssub.s32 3072, 3072
      %46 = vsyncadd [#allocation6], %s45
      %s47 = sshll.u32 [#allocation7], 4
      %s48 = int_to_ptr.vmem [resolvable:$true] %s47
      %53 = dma.hbm_to_vmem [thread:$0]  %s3, 3072, %s48, [#allocation6], 64, 64, 4
    $region17: #{_forward_padded.1} parent=1 // pred_fallthru
      _
    // Predicated region
    $region18: #{_forward_padded.1} parent=1 // pred_check
      _
    $region19: #{_forward_padded.1} parent=1 // pred_check_branch
      %55 = sbr.rel (0) target = $region21
    $region20: #{_forward_padded.1} parent=1 // pred_region
      _
    $region21: #{_forward_padded.1} parent=1 // pred_fallthru
      _
    // Predicated region
    $region22: #{_forward_padded.1} parent=1 // pred_check
      _
    $region23: #{_forward_padded.1} parent=1 // pred_check_branch
      %57 = sbr.rel (0) target = $region25
    $region24: #{_forward_padded.1} parent=1 // pred_region
      %s59 = ssub.s32 1024, 1024
      %60 = vsyncadd [#allocation9], %s59
      %s61 = sshll.u32 [#allocation8], 4
      %s62 = int_to_ptr.vmem [resolvable:$true] %s61
      %67 = dma.hbm_to_vmem [thread:$0]  %s5, 1024, %s62, [#allocation9], 64, 64, 4
    $region25: #{_forward_padded.1} parent=1 // pred_fallthru
      _
    // Predicated region
    $region26: #{_forward_padded.1} parent=1 // pred_check
      _
    $region27: #{_forward_padded.1} parent=1 // pred_check_branch
      %69 = sbr.rel (0) target = $region29
    $region28: #{_forward_padded.1} parent=1 // pred_region
      _
    $region29: #{_forward_padded.1} parent=1 // pred_fallthru
      _
    // Predicated region
    $region30: #{_forward_padded.1} parent=1 // pred_check
      _
    $region31: #{_forward_padded.1} parent=1 // pred_check_branch
      %71 = sbr.rel (0) target = $region33
    $region32: #{_forward_padded.1} parent=1 // pred_region
      %72 = dma.done [#allocation3], 1792
    $region33: #{_forward_padded.1} parent=1 // pred_fallthru
      _
    // Predicated region
    $region34: #{_forward_padded.1} parent=1 // pred_check
      _
    $region35: #{_forward_padded.1} parent=1 // pred_check_branch
      %74 = sbr.rel (0) target = $region37
    $region36: #{_forward_padded.1} parent=1 // pred_region
      %75 = dma.done [#allocation6], 18816
    $region37: #{_forward_padded.1} parent=1 // pred_fallthru
      _
    // Predicated region
    $region38: #{_forward_padded.1} parent=1 // pred_check
      _
    $region39: #{_forward_padded.1} parent=1 // pred_check_branch
      %77 = sbr.rel (0) target = $region41
    $region40: #{_forward_padded.1} parent=1 // pred_region
      %78 = dma.done [#allocation6], 3072
    $region41: #{_forward_padded.1} parent=1 // pred_fallthru
      _
    // Predicated region
    $region42: #{_forward_padded.1} parent=1 // pred_check
      _
    $region43: #{_forward_padded.1} parent=1 // pred_check_branch
      %80 = sbr.rel (0) target = $region45
    $region44: #{_forward_padded.1} parent=1 // pred_region
      %81 = dma.done [#allocation9], 1024
    $region45: #{_forward_padded.1} parent=1 // pred_fallthru
      _
    %v83 = vld [vmem:[#allocation2] sm:$0xff]
    %v84 = vld [vmem:[#allocation2 + $0x8] sm:$0xff]
    %v85 = vld [vmem:[#allocation2 + $0x10] sm:$0xff]
    %v86 = vld [vmem:[#allocation2 + $0x18] sm:$0xff]
    %v87 = vld [vmem:[#allocation2 + $0x20] sm:$0xff]
    %v88 = vld [vmem:[#allocation2 + $0x28] sm:$0xff]
    %v89 = vld [vmem:[#allocation2 + $0x30] sm:$0xff]
    %v90 = vld [vmem:[#allocation2 + $0x38] sm:$0xff]
    %v91 = vld [vmem:[#allocation2 + $0x40] sm:$0xff]
    %v92 = vld [vmem:[#allocation2 + $0x48] sm:$0xff]
    %v93 = vld [vmem:[#allocation2 + $0x50] sm:$0xff]
    %v94 = vld [vmem:[#allocation2 + $0x58] sm:$0xff]
    %v95 = vld [vmem:[#allocation2 + $0x60] sm:$0xff]
    %v96 = vld [vmem:[#allocation2 + $0x68] sm:$0xff]
    %v97 = vpack.c.bf16 %v90, %v83
    %v98 = vpack.c.bf16 %v91, %v84
    %v99 = vpack.c.bf16 %v92, %v85
    %v100 = vpack.c.bf16 %v93, %v86
    %v101 = vpack.c.bf16 %v94, %v87
    %v102 = vpack.c.bf16 %v95, %v88
    %v103 = vpack.c.bf16 %v96, %v89
    %v104 = vld [vmem:[#allocation5] sm:$0xff]
    %v105 = vld [vmem:[#allocation5 + $0x8] sm:$0xf]
    %v106 = vld [vmem:[#allocation5 + $0xc] sm:$0xff]
    %v107 = vld [vmem:[#allocation5 + $0x14] sm:$0xf]
    %v108 = vld [vmem:[#allocation5 + $0x18] sm:$0xff]
    %v109 = vld [vmem:[#allocation5 + $0x20] sm:$0xf]
    %v110 = vld [vmem:[#allocation5 + $0x24] sm:$0xff]
    %v111 = vld [vmem:[#allocation5 + $0x2c] sm:$0xf]
    %v112 = vld [vmem:[#allocation5 + $0x30] sm:$0xff]
    %v113 = vld [vmem:[#allocation5 + $0x38] sm:$0xf]
    %v114 = vld [vmem:[#allocation5 + $0x3c] sm:$0xff]
    %v115 = vld [vmem:[#allocation5 + $0x44] sm:$0xf]
    %v116 = vld [vmem:[#allocation5 + $0x48] sm:$0xff]
    %v117 = vld [vmem:[#allocation5 + $0x50] sm:$0xf]
    %v118 = vld [vmem:[#allocation5 + $0x54] sm:$0xff]
    %v119 = vld [vmem:[#allocation5 + $0x5c] sm:$0xf]
    %v120 = vld [vmem:[#allocation5 + $0x60] sm:$0xff]
    %v121 = vld [vmem:[#allocation5 + $0x68] sm:$0xf]
    %v122 = vld [vmem:[#allocation5 + $0x6c] sm:$0xff]
    %v123 = vld [vmem:[#allocation5 + $0x74] sm:$0xf]
    %v124 = vld [vmem:[#allocation5 + $0x78] sm:$0xff]
    %v125 = vld [vmem:[#allocation5 + $0x80] sm:$0xf]
    %v126 = vld [vmem:[#allocation5 + $0x84] sm:$0xff]
    %v127 = vld [vmem:[#allocation5 + $0x8c] sm:$0xf]
    %v128 = vld [vmem:[#allocation5 + $0x90] sm:$0xff]
    %v129 = vld [vmem:[#allocation5 + $0x98] sm:$0xf]
    %v130 = vld [vmem:[#allocation5 + $0x9c] sm:$0xff]
    %v131 = vld [vmem:[#allocation5 + $0xa4] sm:$0xf]
    %v132 = vld [vmem:[#allocation5 + $0xa8] sm:$0xff]
    %v133 = vld [vmem:[#allocation5 + $0xb0] sm:$0xf]
    %v134 = vld [vmem:[#allocation5 + $0xb4] sm:$0xff]
    %v135 = vld [vmem:[#allocation5 + $0xbc] sm:$0xf]
    %v136 = vld [vmem:[#allocation5 + $0xc0] sm:$0xff]
    %v137 = vld [vmem:[#allocation5 + $0xc8] sm:$0xf]
    %v138 = vld [vmem:[#allocation5 + $0xcc] sm:$0xff]
    %v139 = vld [vmem:[#allocation5 + $0xd4] sm:$0xf]
    %v140 = vld [vmem:[#allocation5 + $0xd8] sm:$0xff]
    %v141 = vld [vmem:[#allocation5 + $0xe0] sm:$0xf]
    %v142 = vld [vmem:[#allocation5 + $0xe4] sm:$0xff]
    %v143 = vld [vmem:[#allocation5 + $0xec] sm:$0xf]
    %v144 = vld [vmem:[#allocation5 + $0xf0] sm:$0xff]
    %v145 = vld [vmem:[#allocation5 + $0xf8] sm:$0xf]
    %v146 = vld [vmem:[#allocation5 + $0xfc] sm:$0xff]
    %v147 = vld [vmem:[#allocation5 + $0x104] sm:$0xf]
    %v148 = vld [vmem:[#allocation5 + $0x108] sm:$0xff]
    %v149 = vld [vmem:[#allocation5 + $0x110] sm:$0xf]
    %v150 = vld [vmem:[#allocation5 + $0x114] sm:$0xff]
    %v151 = vld [vmem:[#allocation5 + $0x11c] sm:$0xf]
    %v152 = vld [vmem:[#allocation5 + $0x120] sm:$0xff]
    %v153 = vld [vmem:[#allocation5 + $0x128] sm:$0xf]
    %v154 = vld [vmem:[#allocation5 + $0x12c] sm:$0xff]
    %v155 = vld [vmem:[#allocation5 + $0x134] sm:$0xf]
    %v156 = vld [vmem:[#allocation5 + $0x138] sm:$0xff]
    %v157 = vld [vmem:[#allocation5 + $0x140] sm:$0xf]
    %v158 = vld [vmem:[#allocation5 + $0x144] sm:$0xff]
    %v159 = vld [vmem:[#allocation5 + $0x14c] sm:$0xf]
    %v160 = vld [vmem:[#allocation5 + $0x150] sm:$0xff]
    %v161 = vld [vmem:[#allocation5 + $0x158] sm:$0xf]
    %v162 = vld [vmem:[#allocation5 + $0x15c] sm:$0xff]
    %v163 = vld [vmem:[#allocation5 + $0x164] sm:$0xf]
    %v164 = vld [vmem:[#allocation5 + $0x168] sm:$0xff]
    %v165 = vld [vmem:[#allocation5 + $0x170] sm:$0xf]
    %v166 = vld [vmem:[#allocation5 + $0x174] sm:$0xff]
    %v167 = vld [vmem:[#allocation5 + $0x17c] sm:$0xf]
    %v168 = vld [vmem:[#allocation5 + $0x180] sm:$0xff]
    %v169 = vld [vmem:[#allocation5 + $0x188] sm:$0xf]
    %v170 = vld [vmem:[#allocation5 + $0x18c] sm:$0xff]
    %v171 = vld [vmem:[#allocation5 + $0x194] sm:$0xf]
    %v172 = vld [vmem:[#allocation5 + $0x198] sm:$0xff]
    %v173 = vld [vmem:[#allocation5 + $0x1a0] sm:$0xf]
    %v174 = vld [vmem:[#allocation5 + $0x1a4] sm:$0xff]
    %v175 = vld [vmem:[#allocation5 + $0x1ac] sm:$0xf]
    %v176 = vld [vmem:[#allocation5 + $0x1b0] sm:$0xff]
    %v177 = vld [vmem:[#allocation5 + $0x1b8] sm:$0xf]
    %v178 = vld [vmem:[#allocation5 + $0x1bc] sm:$0xff]
    %v179 = vld [vmem:[#allocation5 + $0x1c4] sm:$0xf]
    %v180 = vld [vmem:[#allocation5 + $0x1c8] sm:$0xff]
    %v181 = vld [vmem:[#allocation5 + $0x1d0] sm:$0xf]
    %v182 = vld [vmem:[#allocation5 + $0x1d4] sm:$0xff]
    %v183 = vld [vmem:[#allocation5 + $0x1dc] sm:$0xf]
    %v184 = vld [vmem:[#allocation5 + $0x1e0] sm:$0xff]
    %v185 = vld [vmem:[#allocation5 + $0x1e8] sm:$0xf]
    %v186 = vld [vmem:[#allocation5 + $0x1ec] sm:$0xff]
    %v187 = vld [vmem:[#allocation5 + $0x1f4] sm:$0xf]
    %v188 = vld [vmem:[#allocation5 + $0x1f8] sm:$0xff]
    %v189 = vld [vmem:[#allocation5 + $0x200] sm:$0xf]
    %v190 = vld [vmem:[#allocation5 + $0x204] sm:$0xff]
    %v191 = vld [vmem:[#allocation5 + $0x20c] sm:$0xf]
    %v192 = vld [vmem:[#allocation5 + $0x210] sm:$0xff]
    %v193 = vld [vmem:[#allocation5 + $0x218] sm:$0xf]
    %v194 = vld [vmem:[#allocation5 + $0x21c] sm:$0xff]
    %v195 = vld [vmem:[#allocation5 + $0x224] sm:$0xf]
    %v196 = vld [vmem:[#allocation5 + $0x228] sm:$0xff]
    %v197 = vld [vmem:[#allocation5 + $0x230] sm:$0xf]
    %v198 = vld [vmem:[#allocation5 + $0x234] sm:$0xff]
    %v199 = vld [vmem:[#allocation5 + $0x23c] sm:$0xf]
    %v200 = vld [vmem:[#allocation5 + $0x240] sm:$0xff]
    %v201 = vld [vmem:[#allocation5 + $0x248] sm:$0xf]
    %v202 = vld [vmem:[#allocation5 + $0x24c] sm:$0xff]
    %v203 = vld [vmem:[#allocation5 + $0x254] sm:$0xf]
    %v204 = vld [vmem:[#allocation5 + $0x258] sm:$0xff]
    %v205 = vld [vmem:[#allocation5 + $0x260] sm:$0xf]
    %v206 = vld [vmem:[#allocation5 + $0x264] sm:$0xff]
    %v207 = vld [vmem:[#allocation5 + $0x26c] sm:$0xf]
    %v208 = vld [vmem:[#allocation5 + $0x270] sm:$0xff]
    %v209 = vld [vmem:[#allocation5 + $0x278] sm:$0xf]
    %v210 = vld [vmem:[#allocation5 + $0x27c] sm:$0xff]
    %v211 = vld [vmem:[#allocation5 + $0x284] sm:$0xf]
    %v212 = vld [vmem:[#allocation5 + $0x288] sm:$0xff]
    %v213 = vld [vmem:[#allocation5 + $0x290] sm:$0xf]
    %v214 = vld [vmem:[#allocation5 + $0x294] sm:$0xff]
    %v215 = vld [vmem:[#allocation5 + $0x29c] sm:$0xf]
    %v216 = vld [vmem:[#allocation5 + $0x2a0] sm:$0xff]
    %v217 = vld [vmem:[#allocation5 + $0x2a8] sm:$0xf]
    %v218 = vld [vmem:[#allocation5 + $0x2ac] sm:$0xff]
    %v219 = vld [vmem:[#allocation5 + $0x2b4] sm:$0xf]
    %v220 = vld [vmem:[#allocation5 + $0x2b8] sm:$0xff]
    %v221 = vld [vmem:[#allocation5 + $0x2c0] sm:$0xf]
    %v222 = vld [vmem:[#allocation5 + $0x2c4] sm:$0xff]
    %v223 = vld [vmem:[#allocation5 + $0x2cc] sm:$0xf]
    %v224 = vld [vmem:[#allocation5 + $0x2d0] sm:$0xff]
    %v225 = vld [vmem:[#allocation5 + $0x2d8] sm:$0xf]
    %v226 = vld [vmem:[#allocation5 + $0x2dc] sm:$0xff]
    %v227 = vld [vmem:[#allocation5 + $0x2e4] sm:$0xf]
    %v228 = vld [vmem:[#allocation5 + $0x2e8] sm:$0xff]
    %v229 = vld [vmem:[#allocation5 + $0x2f0] sm:$0xf]
    %v230 = vld [vmem:[#allocation5 + $0x2f4] sm:$0xff]
    %v231 = vld [vmem:[#allocation5 + $0x2fc] sm:$0xf]
    %v232 = vld [vmem:[#allocation5 + $0x300] sm:$0xff]
    %v233 = vld [vmem:[#allocation5 + $0x308] sm:$0xf]
    %v234 = vld [vmem:[#allocation5 + $0x30c] sm:$0xff]
    %v235 = vld [vmem:[#allocation5 + $0x314] sm:$0xf]
    %v236 = vld [vmem:[#allocation5 + $0x318] sm:$0xff]
    %v237 = vld [vmem:[#allocation5 + $0x320] sm:$0xf]
    %v238 = vld [vmem:[#allocation5 + $0x324] sm:$0xff]
    %v239 = vld [vmem:[#allocation5 + $0x32c] sm:$0xf]
    %v240 = vld [vmem:[#allocation5 + $0x330] sm:$0xff]
    %v241 = vld [vmem:[#allocation5 + $0x338] sm:$0xf]
    %v242 = vld [vmem:[#allocation5 + $0x33c] sm:$0xff]
    %v243 = vld [vmem:[#allocation5 + $0x344] sm:$0xf]
    %v244 = vld [vmem:[#allocation5 + $0x348] sm:$0xff]
    %v245 = vld [vmem:[#allocation5 + $0x350] sm:$0xf]
    %v246 = vld [vmem:[#allocation5 + $0x354] sm:$0xff]
    %v247 = vld [vmem:[#allocation5 + $0x35c] sm:$0xf]
    %v248 = vld [vmem:[#allocation5 + $0x360] sm:$0xff]
    %v249 = vld [vmem:[#allocation5 + $0x368] sm:$0xf]
    %v250 = vld [vmem:[#allocation5 + $0x36c] sm:$0xff]
    %v251 = vld [vmem:[#allocation5 + $0x374] sm:$0xf]
    %v252 = vld [vmem:[#allocation5 + $0x378] sm:$0xff]
    %v253 = vld [vmem:[#allocation5 + $0x380] sm:$0xf]
    %v254 = vld [vmem:[#allocation5 + $0x384] sm:$0xff]
    %v255 = vld [vmem:[#allocation5 + $0x38c] sm:$0xf]
    %v256 = vld [vmem:[#allocation5 + $0x390] sm:$0xff]
    %v257 = vld [vmem:[#allocation5 + $0x398] sm:$0xf]
    %v258 = vld [vmem:[#allocation5 + $0x39c] sm:$0xff]
    %v259 = vld [vmem:[#allocation5 + $0x3a4] sm:$0xf]
    %v260 = vld [vmem:[#allocation5 + $0x3a8] sm:$0xff]
    %v261 = vld [vmem:[#allocation5 + $0x3b0] sm:$0xf]
    %v262 = vld [vmem:[#allocation5 + $0x3b4] sm:$0xff]
    %v263 = vld [vmem:[#allocation5 + $0x3bc] sm:$0xf]
    %v264 = vld [vmem:[#allocation5 + $0x3c0] sm:$0xff]
    %v265 = vld [vmem:[#allocation5 + $0x3c8] sm:$0xf]
    %v266 = vld [vmem:[#allocation5 + $0x3cc] sm:$0xff]
    %v267 = vld [vmem:[#allocation5 + $0x3d4] sm:$0xf]
    %v268 = vld [vmem:[#allocation5 + $0x3d8] sm:$0xff]
    %v269 = vld [vmem:[#allocation5 + $0x3e0] sm:$0xf]
    %v270 = vld [vmem:[#allocation5 + $0x3e4] sm:$0xff]
    %v271 = vld [vmem:[#allocation5 + $0x3ec] sm:$0xf]
    %v272 = vld [vmem:[#allocation5 + $0x3f0] sm:$0xff]
    %v273 = vld [vmem:[#allocation5 + $0x3f8] sm:$0xf]
    %v274 = vld [vmem:[#allocation5 + $0x3fc] sm:$0xff]
    %v275 = vld [vmem:[#allocation5 + $0x404] sm:$0xf]
    %v276 = vld [vmem:[#allocation5 + $0x408] sm:$0xff]
    %v277 = vld [vmem:[#allocation5 + $0x410] sm:$0xf]
    %v278 = vld [vmem:[#allocation5 + $0x414] sm:$0xff]
    %v279 = vld [vmem:[#allocation5 + $0x41c] sm:$0xf]
    %v280 = vld [vmem:[#allocation5 + $0x420] sm:$0xff]
    %v281 = vld [vmem:[#allocation5 + $0x428] sm:$0xf]
    %v282 = vld [vmem:[#allocation5 + $0x42c] sm:$0xff]
    %v283 = vld [vmem:[#allocation5 + $0x434] sm:$0xf]
    %v284 = vld [vmem:[#allocation5 + $0x438] sm:$0xff]
    %v285 = vld [vmem:[#allocation5 + $0x440] sm:$0xf]
    %v286 = vld [vmem:[#allocation5 + $0x444] sm:$0xff]
    %v287 = vld [vmem:[#allocation5 + $0x44c] sm:$0xf]
    %v288 = vld [vmem:[#allocation5 + $0x450] sm:$0xff]
    %v289 = vld [vmem:[#allocation5 + $0x458] sm:$0xf]
    %v290 = vld [vmem:[#allocation5 + $0x45c] sm:$0xff]
    %v291 = vld [vmem:[#allocation5 + $0x464] sm:$0xf]
    %v292 = vld [vmem:[#allocation5 + $0x468] sm:$0xff]
    %v293 = vld [vmem:[#allocation5 + $0x470] sm:$0xf]
    %v294 = vld [vmem:[#allocation5 + $0x474] sm:$0xff]
    %v295 = vld [vmem:[#allocation5 + $0x47c] sm:$0xf]
    %v296 = vld [vmem:[#allocation5 + $0x480] sm:$0xff]
    %v297 = vld [vmem:[#allocation5 + $0x488] sm:$0xf]
    %v298 = vld [vmem:[#allocation5 + $0x48c] sm:$0xff]
    %v299 = vld [vmem:[#allocation5 + $0x494] sm:$0xf]
    %v300 = vld [vmem:[%s2] sm:$0x7]
    %v302 = vlaneseq
    %v303 = vshrl.u32 %v302, 7
    %v304 = vsub.s32 0, %v303
    %v305 = vrot.slane %v300, %v304
    %v306 = vlaneseq
    %v307 = vshrl.u32 %v306, 7
    %v308 = vsub.s32 1, %v307
    %v309 = vrot.slane %v300, %v308
    %v310 = vlaneseq
    %v311 = vshrl.u32 %v310, 7
    %v312 = vsub.s32 2, %v311
    %v313 = vrot.slane %v300, %v312
    %v513 = vunpack.c.l.b16 %v104
    %v514 = vunpack.c.h.b16 %v104
    %v515 = vunpack.c.l.b16 %v105
    %v516 = vunpack.c.l.b16 %v106
    %v517 = vunpack.c.h.b16 %v106
    %v518 = vunpack.c.l.b16 %v107
    %v519 = vunpack.c.l.b16 %v108
    %v520 = vunpack.c.h.b16 %v108
    %v521 = vunpack.c.l.b16 %v109
    %v522 = vunpack.c.l.b16 %v110
    %v523 = vunpack.c.h.b16 %v110
    %v524 = vunpack.c.l.b16 %v111
    %v525 = vunpack.c.l.b16 %v112
    %v526 = vunpack.c.h.b16 %v112
    %v527 = vunpack.c.l.b16 %v113
    %v528 = vunpack.c.l.b16 %v114
    %v529 = vunpack.c.h.b16 %v114
    %v530 = vunpack.c.l.b16 %v115
    %v531 = vunpack.c.l.b16 %v116
    %v532 = vunpack.c.h.b16 %v116
    %v533 = vunpack.c.l.b16 %v117
    %v534 = vunpack.c.l.b16 %v118
    %v535 = vunpack.c.h.b16 %v118
    %v536 = vunpack.c.l.b16 %v119
    %v537 = vunpack.c.l.b16 %v120
    %v538 = vunpack.c.h.b16 %v120
    %v539 = vunpack.c.l.b16 %v121
    %v540 = vunpack.c.l.b16 %v122
    %v541 = vunpack.c.h.b16 %v122
    %v542 = vunpack.c.l.b16 %v123
    %v543 = vunpack.c.l.b16 %v124
    %v544 = vunpack.c.h.b16 %v124
    %v545 = vunpack.c.l.b16 %v125
    %v546 = vunpack.c.l.b16 %v126
    %v547 = vunpack.c.h.b16 %v126
    %v548 = vunpack.c.l.b16 %v127
    %v549 = vunpack.c.l.b16 %v128
    %v550 = vunpack.c.h.b16 %v128
    %v551 = vunpack.c.l.b16 %v129
    %v552 = vunpack.c.l.b16 %v130
    %v553 = vunpack.c.h.b16 %v130
    %v554 = vunpack.c.l.b16 %v131
    %v555 = vunpack.c.l.b16 %v132
    %v556 = vunpack.c.h.b16 %v132
    %v557 = vunpack.c.l.b16 %v133
    %v558 = vunpack.c.l.b16 %v134
    %v559 = vunpack.c.h.b16 %v134
    %v560 = vunpack.c.l.b16 %v135
    %v561 = vunpack.c.l.b16 %v136
    %v562 = vunpack.c.h.b16 %v136
    %v563 = vunpack.c.l.b16 %v137
    %v564 = vunpack.c.l.b16 %v138
    %v565 = vunpack.c.h.b16 %v138
    %v566 = vunpack.c.l.b16 %v139
    %v567 = vunpack.c.l.b16 %v140
    %v568 = vunpack.c.h.b16 %v140
    %v569 = vunpack.c.l.b16 %v141
    %v570 = vunpack.c.l.b16 %v142
    %v571 = vunpack.c.h.b16 %v142
    %v572 = vunpack.c.l.b16 %v143
    %v573 = vunpack.c.l.b16 %v144
    %v574 = vunpack.c.h.b16 %v144
    %v575 = vunpack.c.l.b16 %v145
    %v576 = vunpack.c.l.b16 %v146
    %v577 = vunpack.c.h.b16 %v146
    %v578 = vunpack.c.l.b16 %v147
    %v579 = vunpack.c.l.b16 %v148
    %v580 = vunpack.c.h.b16 %v148
    %v581 = vunpack.c.l.b16 %v149
    %v582 = vunpack.c.l.b16 %v150
    %v583 = vunpack.c.h.b16 %v150
    %v584 = vunpack.c.l.b16 %v151
    %v585 = vunpack.c.l.b16 %v152
    %v586 = vunpack.c.h.b16 %v152
    %v587 = vunpack.c.l.b16 %v153
    %v588 = vunpack.c.l.b16 %v154
    %v589 = vunpack.c.h.b16 %v154
    %v590 = vunpack.c.l.b16 %v155
    %v591 = vunpack.c.l.b16 %v156
    %v592 = vunpack.c.h.b16 %v156
    %v593 = vunpack.c.l.b16 %v157
    %v594 = vunpack.c.l.b16 %v158
    %v595 = vunpack.c.h.b16 %v158
    %v596 = vunpack.c.l.b16 %v159
    %v597 = vunpack.c.l.b16 %v160
    %v598 = vunpack.c.h.b16 %v160
    %v599 = vunpack.c.l.b16 %v161
    %v600 = vunpack.c.l.b16 %v162
    %v601 = vunpack.c.h.b16 %v162
    %v602 = vunpack.c.l.b16 %v163
    %v603 = vunpack.c.l.b16 %v164
    %v604 = vunpack.c.h.b16 %v164
    %v605 = vunpack.c.l.b16 %v165
    %v606 = vunpack.c.l.b16 %v166
    %v607 = vunpack.c.h.b16 %v166
    %v608 = vunpack.c.l.b16 %v167
    %v609 = vunpack.c.l.b16 %v168
    %v610 = vunpack.c.h.b16 %v168
    %v611 = vunpack.c.l.b16 %v169
    %v612 = vunpack.c.l.b16 %v170
    %v613 = vunpack.c.h.b16 %v170
    %v614 = vunpack.c.l.b16 %v171
    %v615 = vunpack.c.l.b16 %v172
    %v616 = vunpack.c.h.b16 %v172
    %v617 = vunpack.c.l.b16 %v173
    %v618 = vunpack.c.l.b16 %v174
    %v619 = vunpack.c.h.b16 %v174
    %v620 = vunpack.c.l.b16 %v175
    %v621 = vunpack.c.l.b16 %v176
    %v622 = vunpack.c.h.b16 %v176
    %v623 = vunpack.c.l.b16 %v177
    %v624 = vunpack.c.l.b16 %v178
    %v625 = vunpack.c.h.b16 %v178
    %v626 = vunpack.c.l.b16 %v179
    %v627 = vunpack.c.l.b16 %v180
    %v628 = vunpack.c.h.b16 %v180
    %v629 = vunpack.c.l.b16 %v181
    %v630 = vunpack.c.l.b16 %v182
    %v631 = vunpack.c.h.b16 %v182
    %v632 = vunpack.c.l.b16 %v183
    %v633 = vunpack.c.l.b16 %v184
    %v634 = vunpack.c.h.b16 %v184
    %v635 = vunpack.c.l.b16 %v185
    %v636 = vunpack.c.l.b16 %v186
    %v637 = vunpack.c.h.b16 %v186
    %v638 = vunpack.c.l.b16 %v187
    %v639 = vunpack.c.l.b16 %v188
    %v640 = vunpack.c.h.b16 %v188
    %v641 = vunpack.c.l.b16 %v189
    %v642 = vunpack.c.l.b16 %v190
    %v643 = vunpack.c.h.b16 %v190
    %v644 = vunpack.c.l.b16 %v191
    %v645 = vunpack.c.l.b16 %v192
    %v646 = vunpack.c.h.b16 %v192
    %v647 = vunpack.c.l.b16 %v193
    %v648 = vunpack.c.l.b16 %v194
    %v649 = vunpack.c.h.b16 %v194
    %v650 = vunpack.c.l.b16 %v195
    %v651 = vunpack.c.l.b16 %v196
    %v652 = vunpack.c.h.b16 %v196
    %v653 = vunpack.c.l.b16 %v197
    %v654 = vunpack.c.l.b16 %v198
    %v655 = vunpack.c.h.b16 %v198
    %v656 = vunpack.c.l.b16 %v199
    %v657 = vunpack.c.l.b16 %v200
    %v658 = vunpack.c.h.b16 %v200
    %v659 = vunpack.c.l.b16 %v201
    %v660 = vunpack.c.l.b16 %v202
    %v661 = vunpack.c.h.b16 %v202
    %v662 = vunpack.c.l.b16 %v203
    %v663 = vunpack.c.l.b16 %v204
    %v664 = vunpack.c.h.b16 %v204
    %v665 = vunpack.c.l.b16 %v205
    %v666 = vunpack.c.l.b16 %v206
    %v667 = vunpack.c.h.b16 %v206
    %v668 = vunpack.c.l.b16 %v207
    %v669 = vunpack.c.l.b16 %v208
    %v670 = vunpack.c.h.b16 %v208
    %v671 = vunpack.c.l.b16 %v209
    %v672 = vunpack.c.l.b16 %v210
    %v673 = vunpack.c.h.b16 %v210
    %v674 = vunpack.c.l.b16 %v211
    %v675 = vunpack.c.l.b16 %v212
    %v676 = vunpack.c.h.b16 %v212
    %v677 = vunpack.c.l.b16 %v213
    %v678 = vunpack.c.l.b16 %v214
    %v679 = vunpack.c.h.b16 %v214
    %v680 = vunpack.c.l.b16 %v215
    %v681 = vunpack.c.l.b16 %v216
    %v682 = vunpack.c.h.b16 %v216
    %v683 = vunpack.c.l.b16 %v217
    %v684 = vunpack.c.l.b16 %v218
    %v685 = vunpack.c.h.b16 %v218
    %v686 = vunpack.c.l.b16 %v219
    %v687 = vunpack.c.l.b16 %v220
    %v688 = vunpack.c.h.b16 %v220
    %v689 = vunpack.c.l.b16 %v221
    %v690 = vunpack.c.l.b16 %v222
    %v691 = vunpack.c.h.b16 %v222
    %v692 = vunpack.c.l.b16 %v223
    %v693 = vunpack.c.l.b16 %v224
    %v694 = vunpack.c.h.b16 %v224
    %v695 = vunpack.c.l.b16 %v225
    %v696 = vunpack.c.l.b16 %v226
    %v697 = vunpack.c.h.b16 %v226
    %v698 = vunpack.c.l.b16 %v227
    %v699 = vunpack.c.l.b16 %v228
    %v700 = vunpack.c.h.b16 %v228
    %v701 = vunpack.c.l.b16 %v229
    %v702 = vunpack.c.l.b16 %v230
    %v703 = vunpack.c.h.b16 %v230
    %v704 = vunpack.c.l.b16 %v231
    %v705 = vunpack.c.l.b16 %v232
    %v706 = vunpack.c.h.b16 %v232
    %v707 = vunpack.c.l.b16 %v233
    %v708 = vunpack.c.l.b16 %v234
    %v709 = vunpack.c.h.b16 %v234
    %v710 = vunpack.c.l.b16 %v235
    %v711 = vunpack.c.l.b16 %v236
    %v712 = vunpack.c.h.b16 %v236
    %v713 = vunpack.c.l.b16 %v237
    %v714 = vunpack.c.l.b16 %v238
    %v715 = vunpack.c.h.b16 %v238
    %v716 = vunpack.c.l.b16 %v239
    %v717 = vunpack.c.l.b16 %v240
    %v718 = vunpack.c.h.b16 %v240
    %v719 = vunpack.c.l.b16 %v241
    %v720 = vunpack.c.l.b16 %v242
    %v721 = vunpack.c.h.b16 %v242
    %v722 = vunpack.c.l.b16 %v243
    %v723 = vunpack.c.l.b16 %v244
    %v724 = vunpack.c.h.b16 %v244
    %v725 = vunpack.c.l.b16 %v245
    %v726 = vunpack.c.l.b16 %v246
    %v727 = vunpack.c.h.b16 %v246
    %v728 = vunpack.c.l.b16 %v247
    %v729 = vunpack.c.l.b16 %v248
    %v730 = vunpack.c.h.b16 %v248
    %v731 = vunpack.c.l.b16 %v249
    %v732 = vunpack.c.l.b16 %v250
    %v733 = vunpack.c.h.b16 %v250
    %v734 = vunpack.c.l.b16 %v251
    %v735 = vunpack.c.l.b16 %v252
    %v736 = vunpack.c.h.b16 %v252
    %v737 = vunpack.c.l.b16 %v253
    %v738 = vunpack.c.l.b16 %v254
    %v739 = vunpack.c.h.b16 %v254
    %v740 = vunpack.c.l.b16 %v255
    %v741 = vunpack.c.l.b16 %v256
    %v742 = vunpack.c.h.b16 %v256
    %v743 = vunpack.c.l.b16 %v257
    %v744 = vunpack.c.l.b16 %v258
    %v745 = vunpack.c.h.b16 %v258
    %v746 = vunpack.c.l.b16 %v259
    %v747 = vunpack.c.l.b16 %v260
    %v748 = vunpack.c.h.b16 %v260
    %v749 = vunpack.c.l.b16 %v261
    %v750 = vunpack.c.l.b16 %v262
    %v751 = vunpack.c.h.b16 %v262
    %v752 = vunpack.c.l.b16 %v263
    %v753 = vunpack.c.l.b16 %v264
    %v754 = vunpack.c.h.b16 %v264
    %v755 = vunpack.c.l.b16 %v265
    %v756 = vunpack.c.l.b16 %v266
    %v757 = vunpack.c.h.b16 %v266
    %v758 = vunpack.c.l.b16 %v267
    %v759 = vunpack.c.l.b16 %v268
    %v760 = vunpack.c.h.b16 %v268
    %v761 = vunpack.c.l.b16 %v269
    %v762 = vunpack.c.l.b16 %v270
    %v763 = vunpack.c.h.b16 %v270
    %v764 = vunpack.c.l.b16 %v271
    %v765 = vunpack.c.l.b16 %v272
    %v766 = vunpack.c.h.b16 %v272
    %v767 = vunpack.c.l.b16 %v273
    %v768 = vunpack.c.l.b16 %v274
    %v769 = vunpack.c.h.b16 %v274
    %v770 = vunpack.c.l.b16 %v275
    %v771 = vunpack.c.l.b16 %v276
    %v772 = vunpack.c.h.b16 %v276
    %v773 = vunpack.c.l.b16 %v277
    %v774 = vunpack.c.l.b16 %v278
    %v775 = vunpack.c.h.b16 %v278
    %v776 = vunpack.c.l.b16 %v279
    %v777 = vunpack.c.l.b16 %v280
    %v778 = vunpack.c.h.b16 %v280
    %v779 = vunpack.c.l.b16 %v281
    %v780 = vunpack.c.l.b16 %v282
    %v781 = vunpack.c.h.b16 %v282
    %v782 = vunpack.c.l.b16 %v283
    %v783 = vunpack.c.l.b16 %v284
    %v784 = vunpack.c.h.b16 %v284
    %v785 = vunpack.c.l.b16 %v285
    %v786 = vunpack.c.l.b16 %v286
    %v787 = vunpack.c.h.b16 %v286
    %v788 = vunpack.c.l.b16 %v287
    %v789 = vunpack.c.l.b16 %v288
    %v790 = vunpack.c.h.b16 %v288
    %v791 = vunpack.c.l.b16 %v289
    %v792 = vunpack.c.l.b16 %v290
    %v793 = vunpack.c.h.b16 %v290
    %v794 = vunpack.c.l.b16 %v291
    %v795 = vunpack.c.l.b16 %v292
    %v796 = vunpack.c.h.b16 %v292
    %v797 = vunpack.c.l.b16 %v293
    %v798 = vunpack.c.l.b16 %v294
    %v799 = vunpack.c.h.b16 %v294
    %v800 = vunpack.c.l.b16 %v295
    %v801 = vunpack.c.l.b16 %v296
    %v802 = vunpack.c.h.b16 %v296
    %v803 = vunpack.c.l.b16 %v297
    %v804 = vunpack.c.l.b16 %v298
    %v805 = vunpack.c.h.b16 %v298
    %v806 = vunpack.c.l.b16 %v299
    %v807 = vpack.c.b16 %v516, %v513
    %v808 = vpack.c.b16 %v517, %v514
    %v809 = vpack.c.b16 %v518, %v515
    %v810 = vpack.c.b16 %v522, %v519
    %v811 = vpack.c.b16 %v523, %v520
    %v812 = vpack.c.b16 %v524, %v521
    %v813 = vpack.c.b16 %v528, %v525
    %v814 = vpack.c.b16 %v529, %v526
    %v815 = vpack.c.b16 %v530, %v527
    %v816 = vpack.c.b16 %v534, %v531
    %v817 = vpack.c.b16 %v535, %v532
    %v818 = vpack.c.b16 %v536, %v533
    %v819 = vpack.c.b16 %v540, %v537
    %v820 = vpack.c.b16 %v541, %v538
    %v821 = vpack.c.b16 %v542, %v539
    %v822 = vpack.c.b16 %v546, %v543
    %v823 = vpack.c.b16 %v547, %v544
    %v824 = vpack.c.b16 %v548, %v545
    %v825 = vpack.c.b16 %v552, %v549
    %v826 = vpack.c.b16 %v553, %v550
    %v827 = vpack.c.b16 %v554, %v551
    %v828 = vpack.c.b16 %v558, %v555
    %v829 = vpack.c.b16 %v559, %v556
    %v830 = vpack.c.b16 %v560, %v557
    %v831 = vpack.c.b16 %v564, %v561
    %v832 = vpack.c.b16 %v565, %v562
    %v833 = vpack.c.b16 %v566, %v563
    %v834 = vpack.c.b16 %v570, %v567
    %v835 = vpack.c.b16 %v571, %v568
    %v836 = vpack.c.b16 %v572, %v569
    %v837 = vpack.c.b16 %v576, %v573
    %v838 = vpack.c.b16 %v577, %v574
    %v839 = vpack.c.b16 %v578, %v575
    %v840 = vpack.c.b16 %v582, %v579
    %v841 = vpack.c.b16 %v583, %v580
    %v842 = vpack.c.b16 %v584, %v581
    %v843 = vpack.c.b16 %v588, %v585
    %v844 = vpack.c.b16 %v589, %v586
    %v845 = vpack.c.b16 %v590, %v587
    %v846 = vpack.c.b16 %v594, %v591
    %v847 = vpack.c.b16 %v595, %v592
    %v848 = vpack.c.b16 %v596, %v593
    %v849 = vpack.c.b16 %v600, %v597
    %v850 = vpack.c.b16 %v601, %v598
    %v851 = vpack.c.b16 %v602, %v599
    %v852 = vpack.c.b16 %v606, %v603
    %v853 = vpack.c.b16 %v607, %v604
    %v854 = vpack.c.b16 %v608, %v605
    %v855 = vpack.c.b16 %v612, %v609
    %v856 = vpack.c.b16 %v613, %v610
    %v857 = vpack.c.b16 %v614, %v611
    %v858 = vpack.c.b16 %v618, %v615
    %v859 = vpack.c.b16 %v619, %v616
    %v860 = vpack.c.b16 %v620, %v617
    %v861 = vpack.c.b16 %v624, %v621
    %v862 = vpack.c.b16 %v625, %v622
    %v863 = vpack.c.b16 %v626, %v623
    %v864 = vpack.c.b16 %v630, %v627
    %v865 = vpack.c.b16 %v631, %v628
    %v866 = vpack.c.b16 %v632, %v629
    %v867 = vpack.c.b16 %v636, %v633
    %v868 = vpack.c.b16 %v637, %v634
    %v869 = vpack.c.b16 %v638, %v635
    %v870 = vpack.c.b16 %v642, %v639
    %v871 = vpack.c.b16 %v643, %v640
    %v872 = vpack.c.b16 %v644, %v641
    %v873 = vpack.c.b16 %v648, %v645
    %v874 = vpack.c.b16 %v649, %v646
    %v875 = vpack.c.b16 %v650, %v647
    %v876 = vpack.c.b16 %v654, %v651
    %v877 = vpack.c.b16 %v655, %v652
    %v878 = vpack.c.b16 %v656, %v653
    %v879 = vpack.c.b16 %v660, %v657
    %v880 = vpack.c.b16 %v661, %v658
    %v881 = vpack.c.b16 %v662, %v659
    %v882 = vpack.c.b16 %v666, %v663
    %v883 = vpack.c.b16 %v667, %v664
    %v884 = vpack.c.b16 %v668, %v665
    %v885 = vpack.c.b16 %v672, %v669
    %v886 = vpack.c.b16 %v673, %v670
    %v887 = vpack.c.b16 %v674, %v671
    %v888 = vpack.c.b16 %v678, %v675
    %v889 = vpack.c.b16 %v679, %v676
    %v890 = vpack.c.b16 %v680, %v677
    %v891 = vpack.c.b16 %v684, %v681
    %v892 = vpack.c.b16 %v685, %v682
    %v893 = vpack.c.b16 %v686, %v683
    %v894 = vpack.c.b16 %v690, %v687
    %v895 = vpack.c.b16 %v691, %v688
    %v896 = vpack.c.b16 %v692, %v689
    %v897 = vpack.c.b16 %v696, %v693
    %v898 = vpack.c.b16 %v697, %v694
    %v899 = vpack.c.b16 %v698, %v695
    %v900 = vpack.c.b16 %v702, %v699
    %v901 = vpack.c.b16 %v703, %v700
    %v902 = vpack.c.b16 %v704, %v701
    %v903 = vpack.c.b16 %v708, %v705
    %v904 = vpack.c.b16 %v709, %v706
    %v905 = vpack.c.b16 %v710, %v707
    %v906 = vpack.c.b16 %v714, %v711
    %v907 = vpack.c.b16 %v715, %v712
    %v908 = vpack.c.b16 %v716, %v713
    %v909 = vpack.c.b16 %v720, %v717
    %v910 = vpack.c.b16 %v721, %v718
    %v911 = vpack.c.b16 %v722, %v719
    %v912 = vpack.c.b16 %v726, %v723
    %v913 = vpack.c.b16 %v727, %v724
    %v914 = vpack.c.b16 %v728, %v725
    %v915 = vpack.c.b16 %v732, %v729
    %v916 = vpack.c.b16 %v733, %v730
    %v917 = vpack.c.b16 %v734, %v731
    %v918 = vpack.c.b16 %v738, %v735
    %v919 = vpack.c.b16 %v739, %v736
    %v920 = vpack.c.b16 %v740, %v737
    %v921 = vpack.c.b16 %v744, %v741
    %v922 = vpack.c.b16 %v745, %v742
    %v923 = vpack.c.b16 %v746, %v743
    %v924 = vpack.c.b16 %v750, %v747
    %v925 = vpack.c.b16 %v751, %v748
    %v926 = vpack.c.b16 %v752, %v749
    %v927 = vpack.c.b16 %v756, %v753
    %v928 = vpack.c.b16 %v757, %v754
    %v929 = vpack.c.b16 %v758, %v755
    %v930 = vpack.c.b16 %v762, %v759
    %v931 = vpack.c.b16 %v763, %v760
    %v932 = vpack.c.b16 %v764, %v761
    %v933 = vpack.c.b16 %v768, %v765
    %v934 = vpack.c.b16 %v769, %v766
    %v935 = vpack.c.b16 %v770, %v767
    %v936 = vpack.c.b16 %v774, %v771
    %v937 = vpack.c.b16 %v775, %v772
    %v938 = vpack.c.b16 %v776, %v773
    %v939 = vpack.c.b16 %v780, %v777
    %v940 = vpack.c.b16 %v781, %v778
    %v941 = vpack.c.b16 %v782, %v779
    %v942 = vpack.c.b16 %v786, %v783
    %v943 = vpack.c.b16 %v787, %v784
    %v944 = vpack.c.b16 %v788, %v785
    %v945 = vpack.c.b16 %v792, %v789
    %v946 = vpack.c.b16 %v793, %v790
    %v947 = vpack.c.b16 %v794, %v791
    %v948 = vpack.c.b16 %v798, %v795
    %v949 = vpack.c.b16 %v799, %v796
    %v950 = vpack.c.b16 %v800, %v797
    %v951 = vpack.c.b16 %v804, %v801
    %v952 = vpack.c.b16 %v805, %v802
    %v953 = vpack.c.b16 %v806, %v803
    %vm1101 = vcmask 130048
    %v1103 = vsel %vm1101, %v103, 0
    %1105 = vmatprep.subr.bf16.mxu0 %v808
    %1106 = vmatpush1.bf16.msra.mxu0 %v807
    %1107 = vmatprep.subr.bf16.mxu0 %v811
    %1108 = vmatpush1.bf16.msra.mxu0 %v810
    %1109 = vmatprep.subr.bf16.mxu0 %v814
    %1110 = vmatpush1.bf16.msra.mxu0 %v813
    %1111 = vmatprep.subr.bf16.mxu0 %v817
    %1112 = vmatpush1.bf16.msra.mxu0 %v816
    %1113 = vmatprep.subr.bf16.mxu0 %v820
    %1114 = vmatpush1.bf16.msra.mxu0 %v819
    %1115 = vmatprep.subr.bf16.mxu0 %v823
    %1116 = vmatpush1.bf16.msra.mxu0 %v822
    %1117 = vmatprep.subr.bf16.mxu0 %v826
    %1118 = vmatpush1.bf16.msra.mxu0 %v825
    %1119 = vmatprep.subr.bf16.mxu0 %v829
    %1120 = vmatpush1.bf16.msra.mxu0 %v828
    %1121 = vmatprep.subr.bf16.mxu0 %v832
    %1122 = vmatpush1.bf16.msra.mxu0 %v831
    %1123 = vmatprep.subr.bf16.mxu0 %v835
    %1124 = vmatpush1.bf16.msra.mxu0 %v834
    %1125 = vmatprep.subr.bf16.mxu0 %v838
    %1126 = vmatpush1.bf16.msra.mxu0 %v837
    %1127 = vmatprep.subr.bf16.mxu0 %v841
    %1128 = vmatpush1.bf16.msra.mxu0 %v840
    %1129 = vmatprep.subr.bf16.mxu0 %v844
    %1130 = vmatpush1.bf16.msra.mxu0 %v843
    %1131 = vmatprep.subr.bf16.mxu0 %v847
    %1132 = vmatpush1.bf16.msra.mxu0 %v846
    %1133 = vmatprep.subr.bf16.mxu0 %v850
    %1134 = vmatpush1.bf16.msra.mxu0 %v849
    %1135 = vmatprep.subr.bf16.mxu0 %v853
    %1136 = vmatpush1.bf16.msra.mxu0 %v852
    %1137 = vmatprep.mubr.bf16.mxu0 %v98
    %1138 = vmatmul.mubr.bf16.gmra.mrb[0].mxu0 %v97
    %v1139 = vpop.f32.mrb[0].mxu0
    %v1140 = vadd.f32 %v305, %v1139
    %v1141 = vpop.f32.mrb[0].mxu0
    %v1142 = vadd.f32 %v309, %v1141
    %v1143 = vpop.f32.mrb[0].mxu0
    %v1144 = vadd.f32 %v305, %v1143
    %v1145 = vpop.f32.mrb[0].mxu0
    %v1146 = vadd.f32 %v309, %v1145
    %1147 = vdwg.mxu0
    %1148 = vmatprep.subr.bf16.mxu0 %v856
    %1149 = vmatpush1.bf16.msra.mxu0 %v855
    %1150 = vmatprep.subr.bf16.mxu0 %v859
    %1151 = vmatpush1.bf16.msra.mxu0 %v858
    %1152 = vmatprep.subr.bf16.mxu0 %v862
    %1153 = vmatpush1.bf16.msra.mxu0 %v861
    %1154 = vmatprep.subr.bf16.mxu0 %v865
    %1155 = vmatpush1.bf16.msra.mxu0 %v864
    %1156 = vmatprep.subr.bf16.mxu0 %v868
    %1157 = vmatpush1.bf16.msra.mxu0 %v867
    %1158 = vmatprep.subr.bf16.mxu0 %v871
    %1159 = vmatpush1.bf16.msra.mxu0 %v870
    %1160 = vmatprep.subr.bf16.mxu0 %v874
    %1161 = vmatpush1.bf16.msra.mxu0 %v873
    %1162 = vmatprep.subr.bf16.mxu0 %v877
    %1163 = vmatpush1.bf16.msra.mxu0 %v876
    %1164 = vmatprep.subr.bf16.mxu0 %v880
    %1165 = vmatpush1.bf16.msra.mxu0 %v879
    %1166 = vmatprep.subr.bf16.mxu0 %v883
    %1167 = vmatpush1.bf16.msra.mxu0 %v882
    %1168 = vmatprep.subr.bf16.mxu0 %v886
    %1169 = vmatpush1.bf16.msra.mxu0 %v885
    %1170 = vmatprep.subr.bf16.mxu0 %v889
    %1171 = vmatpush1.bf16.msra.mxu0 %v888
    %1172 = vmatprep.subr.bf16.mxu0 %v892
    %1173 = vmatpush1.bf16.msra.mxu0 %v891
    %1174 = vmatprep.subr.bf16.mxu0 %v895
    %1175 = vmatpush1.bf16.msra.mxu0 %v894
    %1176 = vmatprep.subr.bf16.mxu0 %v898
    %1177 = vmatpush1.bf16.msra.mxu0 %v897
    %1178 = vmatprep.subr.bf16.mxu0 %v901
    %1179 = vmatpush1.bf16.msra.mxu0 %v900
    %1180 = vmatprep.mubr.bf16.mxu0 %v100
    %1181 = vmatmul.mubr.bf16.gmra.mrb[0].mxu0 %v99
    %v1182 = vpop.f32.mrb[0].mxu0
    %v1183 = vadd.f32 %v1140, %v1182
    %v1184 = vpop.f32.mrb[0].mxu0
    %v1185 = vadd.f32 %v1142, %v1184
    %v1186 = vpop.f32.mrb[0].mxu0
    %v1187 = vadd.f32 %v1144, %v1186
    %v1188 = vpop.f32.mrb[0].mxu0
    %v1189 = vadd.f32 %v1146, %v1188
    %1190 = vdwg.mxu0
    %1191 = vmatprep.subr.bf16.mxu0 %v904
    %1192 = vmatpush1.bf16.msra.mxu0 %v903
    %1193 = vmatprep.subr.bf16.mxu0 %v907
    %1194 = vmatpush1.bf16.msra.mxu0 %v906
    %1195 = vmatprep.subr.bf16.mxu0 %v910
    %1196 = vmatpush1.bf16.msra.mxu0 %v909
    %1197 = vmatprep.subr.bf16.mxu0 %v913
    %1198 = vmatpush1.bf16.msra.mxu0 %v912
    %1199 = vmatprep.subr.bf16.mxu0 %v916
    %1200 = vmatpush1.bf16.msra.mxu0 %v915
    %1201 = vmatprep.subr.bf16.mxu0 %v919
    %1202 = vmatpush1.bf16.msra.mxu0 %v918
    %1203 = vmatprep.subr.bf16.mxu0 %v922
    %1204 = vmatpush1.bf16.msra.mxu0 %v921
    %1205 = vmatprep.subr.bf16.mxu0 %v925
    %1206 = vmatpush1.bf16.msra.mxu0 %v924
    %1207 = vmatprep.subr.bf16.mxu0 %v928
    %1208 = vmatpush1.bf16.msra.mxu0 %v927
    %1209 = vmatprep.subr.bf16.mxu0 %v931
    %1210 = vmatpush1.bf16.msra.mxu0 %v930
    %1211 = vmatprep.subr.bf16.mxu0 %v934
    %1212 = vmatpush1.bf16.msra.mxu0 %v933
    %1213 = vmatprep.subr.bf16.mxu0 %v937
    %1214 = vmatpush1.bf16.msra.mxu0 %v936
    %1215 = vmatprep.subr.bf16.mxu0 %v940
    %1216 = vmatpush1.bf16.msra.mxu0 %v939
    %1217 = vmatprep.subr.bf16.mxu0 %v943
    %1218 = vmatpush1.bf16.msra.mxu0 %v942
    %1219 = vmatprep.subr.bf16.mxu0 %v946
    %1220 = vmatpush1.bf16.msra.mxu0 %v945
    %1221 = vmatprep.subr.bf16.mxu0 %v949
    %1222 = vmatpush1.bf16.msra.mxu0 %v948
    %1223 = vmatprep.mubr.bf16.mxu0 %v102
    %1224 = vmatmul.mubr.bf16.gmra.mrb[0].mxu0 %v101
    %v1225 = vpop.f32.mrb[0].mxu0
    %v1226 = vadd.f32 %v1183, %v1225
    %v1227 = vpop.f32.mrb[0].mxu0
    %v1228 = vadd.f32 %v1185, %v1227
    %v1229 = vpop.f32.mrb[0].mxu0
    %v1230 = vadd.f32 %v1187, %v1229
    %v1231 = vpop.f32.mrb[0].mxu0
    %v1232 = vadd.f32 %v1189, %v1231
    %1233 = vdwg.mxu0
    %1234 = vmatprep.subr.bf16.mxu0 %v952
    %1235 = vmatpush1.bf16.msra.mxu0 %v951
    %1236 = vmatprep.subr.bf16.mxu0 0
    %1237 = vmatpush1.bf16.msra.mxu0 0
    %1238 = vmatprep.subr.bf16.mxu0 0
    %1239 = vmatpush1.bf16.msra.mxu0 0
    %1240 = vmatprep.subr.bf16.mxu0 0
    %1241 = vmatpush1.bf16.msra.mxu0 0
    %1242 = vmatprep.subr.bf16.mxu0 0
    %1243 = vmatpush1.bf16.msra.mxu0 0
    %1244 = vmatprep.subr.bf16.mxu0 0
    %1245 = vmatpush1.bf16.msra.mxu0 0
    %1246 = vmatprep.subr.bf16.mxu0 0
    %1247 = vmatpush1.bf16.msra.mxu0 0
    %1248 = vmatprep.subr.bf16.mxu0 0
    %1249 = vmatpush1.bf16.msra.mxu0 0
    %1250 = vmatprep.subr.bf16.mxu0 0
    %1251 = vmatpush1.bf16.msra.mxu0 0
    %1252 = vmatprep.subr.bf16.mxu0 0
    %1253 = vmatpush1.bf16.msra.mxu0 0
    %1254 = vmatprep.subr.bf16.mxu0 0
    %1255 = vmatpush1.bf16.msra.mxu0 0
    %1256 = vmatprep.subr.bf16.mxu0 0
    %1257 = vmatpush1.bf16.msra.mxu0 0
    %1258 = vmatprep.subr.bf16.mxu0 0
    %1259 = vmatpush1.bf16.msra.mxu0 0
    %1260 = vmatprep.subr.bf16.mxu0 0
    %1261 = vmatpush1.bf16.msra.mxu0 0
    %1262 = vmatprep.subr.bf16.mxu0 0
    %1263 = vmatpush1.bf16.msra.mxu0 0
    %1264 = vmatprep.subr.bf16.mxu0 0
    %1265 = vmatpush1.bf16.msra.mxu0 0
    %1266 = vmatprep.mubr.bf16.mxu0 0
    %1267 = vmatmul.mubr.bf16.gmra.mrb[0].mxu0 %v1103
    %v1268 = vpop.f32.mrb[0].mxu0
    %v1269 = vadd.f32 %v1226, %v1268
    %v1270 = vpop.f32.mrb[0].mxu0
    %v1271 = vadd.f32 %v1228, %v1270
    %v1272 = vpop.f32.mrb[0].mxu0
    %v1273 = vadd.f32 %v1230, %v1272
    %v1274 = vpop.f32.mrb[0].mxu0
    %v1275 = vadd.f32 %v1232, %v1274
    %1276 = vdwg.mxu0
    %1277 = vmatprep.subr.bf16.mxu0 0
    %1278 = vmatpush1.bf16.msra.mxu0 %v809
    %1279 = vmatprep.subr.bf16.mxu0 0
    %1280 = vmatpush1.bf16.msra.mxu0 %v812
    %1281 = vmatprep.subr.bf16.mxu0 0
    %1282 = vmatpush1.bf16.msra.mxu0 %v815
    %1283 = vmatprep.subr.bf16.mxu0 0
    %1284 = vmatpush1.bf16.msra.mxu0 %v818
    %1285 = vmatprep.subr.bf16.mxu0 0
    %1286 = vmatpush1.bf16.msra.mxu0 %v821
    %1287 = vmatprep.subr.bf16.mxu0 0
    %1288 = vmatpush1.bf16.msra.mxu0 %v824
    %1289 = vmatprep.subr.bf16.mxu0 0
    %1290 = vmatpush1.bf16.msra.mxu0 %v827
    %1291 = vmatprep.subr.bf16.mxu0 0
    %1292 = vmatpush1.bf16.msra.mxu0 %v830
    %1293 = vmatprep.subr.bf16.mxu0 0
    %1294 = vmatpush1.bf16.msra.mxu0 %v833
    %1295 = vmatprep.subr.bf16.mxu0 0
    %1296 = vmatpush1.bf16.msra.mxu0 %v836
    %1297 = vmatprep.subr.bf16.mxu0 0
    %1298 = vmatpush1.bf16.msra.mxu0 %v839
    %1299 = vmatprep.subr.bf16.mxu0 0
    %1300 = vmatpush1.bf16.msra.mxu0 %v842
    %1301 = vmatprep.subr.bf16.mxu0 0
    %1302 = vmatpush1.bf16.msra.mxu0 %v845
    %1303 = vmatprep.subr.bf16.mxu0 0
    %1304 = vmatpush1.bf16.msra.mxu0 %v848
    %1305 = vmatprep.subr.bf16.mxu0 0
    %1306 = vmatpush1.bf16.msra.mxu0 %v851
    %1307 = vmatprep.subr.bf16.mxu0 0
    %1308 = vmatpush1.bf16.msra.mxu0 %v854
    %1309 = vmatprep.mubr.bf16.mxu0 %v98
    %1310 = vmatmul.mubr.bf16.gmra.mrb[0].mxu0 %v97
    %v1311 = vpop.f32.mrb[0].mxu0
    %v1312 = vadd.f32 %v313, %v1311
    %v1313 = vpop.f32.mrb[0].mxu0
    %v1314 = vpop.f32.mrb[0].mxu0
    %v1315 = vadd.f32 %v313, %v1314
    %v1316 = vpop.f32.mrb[0].mxu0
    %1317 = vdwg.mxu0
    %1318 = vmatprep.subr.bf16.mxu0 0
    %1319 = vmatpush1.bf16.msra.mxu0 %v857
    %1320 = vmatprep.subr.bf16.mxu0 0
    %1321 = vmatpush1.bf16.msra.mxu0 %v860
    %1322 = vmatprep.subr.bf16.mxu0 0
    %1323 = vmatpush1.bf16.msra.mxu0 %v863
    %1324 = vmatprep.subr.bf16.mxu0 0
    %1325 = vmatpush1.bf16.msra.mxu0 %v866
    %1326 = vmatprep.subr.bf16.mxu0 0
    %1327 = vmatpush1.bf16.msra.mxu0 %v869
    %1328 = vmatprep.subr.bf16.mxu0 0
    %1329 = vmatpush1.bf16.msra.mxu0 %v872
    %1330 = vmatprep.subr.bf16.mxu0 0
    %1331 = vmatpush1.bf16.msra.mxu0 %v875
    %1332 = vmatprep.subr.bf16.mxu0 0
    %1333 = vmatpush1.bf16.msra.mxu0 %v878
    %1334 = vmatprep.subr.bf16.mxu0 0
    %1335 = vmatpush1.bf16.msra.mxu0 %v881
    %1336 = vmatprep.subr.bf16.mxu0 0
    %1337 = vmatpush1.bf16.msra.mxu0 %v884
    %1338 = vmatprep.subr.bf16.mxu0 0
    %1339 = vmatpush1.bf16.msra.mxu0 %v887
    %1340 = vmatprep.subr.bf16.mxu0 0
    %1341 = vmatpush1.bf16.msra.mxu0 %v890
    %1342 = vmatprep.subr.bf16.mxu0 0
    %1343 = vmatpush1.bf16.msra.mxu0 %v893
    %1344 = vmatprep.subr.bf16.mxu0 0
    %1345 = vmatpush1.bf16.msra.mxu0 %v896
    %1346 = vmatprep.subr.bf16.mxu0 0
    %1347 = vmatpush1.bf16.msra.mxu0 %v899
    %1348 = vmatprep.subr.bf16.mxu0 0
    %1349 = vmatpush1.bf16.msra.mxu0 %v902
    %1350 = vmatprep.mubr.bf16.mxu0 %v100
    %1351 = vmatmul.mubr.bf16.gmra.mrb[0].mxu0 %v99
    %v1352 = vpop.f32.mrb[0].mxu0
    %v1353 = vadd.f32 %v1312, %v1352
    %v1354 = vpop.f32.mrb[0].mxu0
    %v1355 = vpop.f32.mrb[0].mxu0
    %v1356 = vadd.f32 %v1315, %v1355
    %v1357 = vpop.f32.mrb[0].mxu0
    %1358 = vdwg.mxu0
    %1359 = vmatprep.subr.bf16.mxu0 0
    %1360 = vmatpush1.bf16.msra.mxu0 %v905
    %1361 = vmatprep.subr.bf16.mxu0 0
    %1362 = vmatpush1.bf16.msra.mxu0 %v908
    %1363 = vmatprep.subr.bf16.mxu0 0
    %1364 = vmatpush1.bf16.msra.mxu0 %v911
    %1365 = vmatprep.subr.bf16.mxu0 0
    %1366 = vmatpush1.bf16.msra.mxu0 %v914
    %1367 = vmatprep.subr.bf16.mxu0 0
    %1368 = vmatpush1.bf16.msra.mxu0 %v917
    %1369 = vmatprep.subr.bf16.mxu0 0
    %1370 = vmatpush1.bf16.msra.mxu0 %v920
    %1371 = vmatprep.subr.bf16.mxu0 0
    %1372 = vmatpush1.bf16.msra.mxu0 %v923
    %1373 = vmatprep.subr.bf16.mxu0 0
    %1374 = vmatpush1.bf16.msra.mxu0 %v926
    %1375 = vmatprep.subr.bf16.mxu0 0
    %1376 = vmatpush1.bf16.msra.mxu0 %v929
    %1377 = vmatprep.subr.bf16.mxu0 0
    %1378 = vmatpush1.bf16.msra.mxu0 %v932
    %1379 = vmatprep.subr.bf16.mxu0 0
    %1380 = vmatpush1.bf16.msra.mxu0 %v935
    %1381 = vmatprep.subr.bf16.mxu0 0
    %1382 = vmatpush1.bf16.msra.mxu0 %v938
    %1383 = vmatprep.subr.bf16.mxu0 0
    %1384 = vmatpush1.bf16.msra.mxu0 %v941
    %1385 = vmatprep.subr.bf16.mxu0 0
    %1386 = vmatpush1.bf16.msra.mxu0 %v944
    %1387 = vmatprep.subr.bf16.mxu0 0
    %1388 = vmatpush1.bf16.msra.mxu0 %v947
    %1389 = vmatprep.subr.bf16.mxu0 0
    %1390 = vmatpush1.bf16.msra.mxu0 %v950
    %1391 = vmatprep.mubr.bf16.mxu0 %v102
    %1392 = vmatmul.mubr.bf16.gmra.mrb[0].mxu0 %v101
    %v1393 = vpop.f32.mrb[0].mxu0
    %v1394 = vadd.f32 %v1353, %v1393
    %v1395 = vpop.f32.mrb[0].mxu0
    %v1396 = vpop.f32.mrb[0].mxu0
    %v1397 = vadd.f32 %v1356, %v1396
    %v1398 = vpop.f32.mrb[0].mxu0
    %1399 = vdwg.mxu0
    %1400 = vmatprep.subr.bf16.mxu0 0
    %1401 = vmatpush1.bf16.msra.mxu0 %v953
    %1402 = vmatprep.subr.bf16.mxu0 0
    %1403 = vmatpush1.bf16.msra.mxu0 0
    %1404 = vmatprep.subr.bf16.mxu0 0
    %1405 = vmatpush1.bf16.msra.mxu0 0
    %1406 = vmatprep.subr.bf16.mxu0 0
    %1407 = vmatpush1.bf16.msra.mxu0 0
    %1408 = vmatprep.subr.bf16.mxu0 0
    %1409 = vmatpush1.bf16.msra.mxu0 0
    %1410 = vmatprep.subr.bf16.mxu0 0
    %1411 = vmatpush1.bf16.msra.mxu0 0
    %1412 = vmatprep.subr.bf16.mxu0 0
    %1413 = vmatpush1.bf16.msra.mxu0 0
    %1414 = vmatprep.subr.bf16.mxu0 0
    %1415 = vmatpush1.bf16.msra.mxu0 0
    %1416 = vmatprep.subr.bf16.mxu0 0
    %1417 = vmatpush1.bf16.msra.mxu0 0
    %1418 = vmatprep.subr.bf16.mxu0 0
    %1419 = vmatpush1.bf16.msra.mxu0 0
    %1420 = vmatprep.subr.bf16.mxu0 0
    %1421 = vmatpush1.bf16.msra.mxu0 0
    %1422 = vmatprep.subr.bf16.mxu0 0
    %1423 = vmatpush1.bf16.msra.mxu0 0
    %1424 = vmatprep.subr.bf16.mxu0 0
    %1425 = vmatpush1.bf16.msra.mxu0 0
    %1426 = vmatprep.subr.bf16.mxu0 0
    %1427 = vmatpush1.bf16.msra.mxu0 0
    %1428 = vmatprep.subr.bf16.mxu0 0
    %1429 = vmatpush1.bf16.msra.mxu0 0
    %1430 = vmatprep.subr.bf16.mxu0 0
    %1431 = vmatpush1.bf16.msra.mxu0 0
    %1432 = vmatprep.mubr.bf16.mxu0 0
    %1433 = vmatmul.mubr.bf16.gmra.mrb[0].mxu0 %v1103
    %v1434 = vpop.f32.mrb[0].mxu0
    %v1435 = vadd.f32 %v1394, %v1434
    %v1436 = vpop.f32.mrb[0].mxu0
    %v1437 = vpop.f32.mrb[0].mxu0
    %v1438 = vadd.f32 %v1397, %v1437
    %v1439 = vpop.f32.mrb[0].mxu0
    %1440 = vdwg.mxu0
    %v1441 = vmax.f32 %v1269, 0.0
    %v1442 = vmax.f32 %v1271, 0.0
    %v1443 = vmax.f32 %v1435, 0.0
    %v1444 = vmax.f32 %v1273, 0.0
    %v1445 = vmax.f32 %v1275, 0.0
    %v1446 = vmax.f32 %v1438, 0.0
    %v1447 = vpack.c.bf16 %v1444, %v1441
    %v1448 = vpack.c.bf16 %v1445, %v1442
    %v1449 = vpack.c.bf16 %v1446, %v1443
    %v1450 = vld [vmem:[#allocation7] sm:$0xf]
    %v1451 = vld [vmem:[#allocation7 + $0x4] sm:$0xf]
    %v1452 = vld [vmem:[#allocation7 + $0x8] sm:$0xf]
    %v1453 = vld [vmem:[#allocation7 + $0xc] sm:$0xf]
    %v1454 = vld [vmem:[#allocation7 + $0x10] sm:$0xf]
    %v1455 = vld [vmem:[#allocation7 + $0x14] sm:$0xf]
    %v1456 = vld [vmem:[#allocation7 + $0x18] sm:$0xf]
    %v1457 = vld [vmem:[#allocation7 + $0x1c] sm:$0xf]
    %v1458 = vld [vmem:[#allocation7 + $0x20] sm:$0xf]
    %v1459 = vld [vmem:[#allocation7 + $0x24] sm:$0xf]
    %v1460 = vld [vmem:[#allocation7 + $0x28] sm:$0xf]
    %v1461 = vld [vmem:[#allocation7 + $0x2c] sm:$0xf]
    %v1462 = vld [vmem:[#allocation7 + $0x30] sm:$0xf]
    %v1463 = vld [vmem:[#allocation7 + $0x34] sm:$0xf]
    %v1464 = vld [vmem:[#allocation7 + $0x38] sm:$0xf]
    %v1465 = vld [vmem:[#allocation7 + $0x3c] sm:$0xf]
    %v1466 = vld [vmem:[#allocation7 + $0x40] sm:$0xf]
    %v1467 = vld [vmem:[#allocation7 + $0x44] sm:$0xf]
    %v1468 = vld [vmem:[#allocation7 + $0x48] sm:$0xf]
    %v1469 = vld [vmem:[#allocation7 + $0x4c] sm:$0xf]
    %v1470 = vld [vmem:[#allocation7 + $0x50] sm:$0xf]
    %v1471 = vld [vmem:[#allocation7 + $0x54] sm:$0xf]
    %v1472 = vld [vmem:[#allocation7 + $0x58] sm:$0xf]
    %v1473 = vld [vmem:[#allocation7 + $0x5c] sm:$0xf]
    %v1474 = vld [vmem:[#allocation7 + $0x60] sm:$0xf]
    %v1475 = vld [vmem:[#allocation7 + $0x64] sm:$0xf]
    %v1476 = vld [vmem:[#allocation7 + $0x68] sm:$0xf]
    %v1477 = vld [vmem:[#allocation7 + $0x6c] sm:$0xf]
    %v1478 = vld [vmem:[#allocation7 + $0x70] sm:$0xf]
    %v1479 = vld [vmem:[#allocation7 + $0x74] sm:$0xf]
    %v1480 = vld [vmem:[#allocation7 + $0x78] sm:$0xf]
    %v1481 = vld [vmem:[#allocation7 + $0x7c] sm:$0xf]
    %v1482 = vld [vmem:[#allocation7 + $0x80] sm:$0xf]
    %v1483 = vld [vmem:[#allocation7 + $0x84] sm:$0xf]
    %v1484 = vld [vmem:[#allocation7 + $0x88] sm:$0xf]
    %v1485 = vld [vmem:[#allocation7 + $0x8c] sm:$0xf]
    %v1486 = vld [vmem:[#allocation7 + $0x90] sm:$0xf]
    %v1487 = vld [vmem:[#allocation7 + $0x94] sm:$0xf]
    %v1488 = vld [vmem:[#allocation7 + $0x98] sm:$0xf]
    %v1489 = vld [vmem:[#allocation7 + $0x9c] sm:$0xf]
    %v1490 = vld [vmem:[#allocation7 + $0xa0] sm:$0xf]
    %v1491 = vld [vmem:[#allocation7 + $0xa4] sm:$0xf]
    %v1492 = vld [vmem:[#allocation7 + $0xa8] sm:$0xf]
    %v1493 = vld [vmem:[#allocation7 + $0xac] sm:$0xf]
    %v1494 = vld [vmem:[#allocation7 + $0xb0] sm:$0xf]
    %v1495 = vld [vmem:[#allocation7 + $0xb4] sm:$0xf]
    %v1496 = vld [vmem:[#allocation7 + $0xb8] sm:$0xf]
    %v1497 = vld [vmem:[#allocation7 + $0xbc] sm:$0xf]
    %v1498 = vld [vmem:[%s4] sm:$0x1]
    %v1500 = vlaneseq
    %v1501 = vshrl.u32 %v1500, 7
    %v1502 = vsub.s32 0, %v1501
    %v1503 = vrot.slane %v1498, %v1502
    %v1553 = vunpack.c.l.b16 %v1450
    %v1554 = vunpack.c.l.b16 %v1451
    %v1555 = vunpack.c.l.b16 %v1452
    %v1556 = vunpack.c.l.b16 %v1453
    %v1557 = vunpack.c.l.b16 %v1454
    %v1558 = vunpack.c.l.b16 %v1455
    %v1559 = vunpack.c.l.b16 %v1456
    %v1560 = vunpack.c.l.b16 %v1457
    %v1561 = vunpack.c.l.b16 %v1458
    %v1562 = vunpack.c.l.b16 %v1459
    %v1563 = vunpack.c.l.b16 %v1460
    %v1564 = vunpack.c.l.b16 %v1461
    %v1565 = vunpack.c.l.b16 %v1462
    %v1566 = vunpack.c.l.b16 %v1463
    %v1567 = vunpack.c.l.b16 %v1464
    %v1568 = vunpack.c.l.b16 %v1465
    %v1569 = vunpack.c.l.b16 %v1466
    %v1570 = vunpack.c.l.b16 %v1467
    %v1571 = vunpack.c.l.b16 %v1468
    %v1572 = vunpack.c.l.b16 %v1469
    %v1573 = vunpack.c.l.b16 %v1470
    %v1574 = vunpack.c.l.b16 %v1471
    %v1575 = vunpack.c.l.b16 %v1472
    %v1576 = vunpack.c.l.b16 %v1473
    %v1577 = vunpack.c.l.b16 %v1474
    %v1578 = vunpack.c.l.b16 %v1475
    %v1579 = vunpack.c.l.b16 %v1476
    %v1580 = vunpack.c.l.b16 %v1477
    %v1581 = vunpack.c.l.b16 %v1478
    %v1582 = vunpack.c.l.b16 %v1479
    %v1583 = vunpack.c.l.b16 %v1480
    %v1584 = vunpack.c.l.b16 %v1481
    %v1585 = vunpack.c.l.b16 %v1482
    %v1586 = vunpack.c.l.b16 %v1483
    %v1587 = vunpack.c.l.b16 %v1484
    %v1588 = vunpack.c.l.b16 %v1485
    %v1589 = vunpack.c.l.b16 %v1486
    %v1590 = vunpack.c.l.b16 %v1487
    %v1591 = vunpack.c.l.b16 %v1488
    %v1592 = vunpack.c.l.b16 %v1489
    %v1593 = vunpack.c.l.b16 %v1490
    %v1594 = vunpack.c.l.b16 %v1491
    %v1595 = vunpack.c.l.b16 %v1492
    %v1596 = vunpack.c.l.b16 %v1493
    %v1597 = vunpack.c.l.b16 %v1494
    %v1598 = vunpack.c.l.b16 %v1495
    %v1599 = vunpack.c.l.b16 %v1496
    %v1600 = vunpack.c.l.b16 %v1497
    %v1601 = vpack.c.b16 %v1554, %v1553
    %v1602 = vpack.c.b16 %v1556, %v1555
    %v1603 = vpack.c.b16 %v1558, %v1557
    %v1604 = vpack.c.b16 %v1560, %v1559
    %v1605 = vpack.c.b16 %v1562, %v1561
    %v1606 = vpack.c.b16 %v1564, %v1563
    %v1607 = vpack.c.b16 %v1566, %v1565
    %v1608 = vpack.c.b16 %v1568, %v1567
    %v1609 = vpack.c.b16 %v1570, %v1569
    %v1610 = vpack.c.b16 %v1572, %v1571
    %v1611 = vpack.c.b16 %v1574, %v1573
    %v1612 = vpack.c.b16 %v1576, %v1575
    %v1613 = vpack.c.b16 %v1578, %v1577
    %v1614 = vpack.c.b16 %v1580, %v1579
    %v1615 = vpack.c.b16 %v1582, %v1581
    %v1616 = vpack.c.b16 %v1584, %v1583
    %v1617 = vpack.c.b16 %v1586, %v1585
    %v1618 = vpack.c.b16 %v1588, %v1587
    %v1619 = vpack.c.b16 %v1590, %v1589
    %v1620 = vpack.c.b16 %v1592, %v1591
    %v1621 = vpack.c.b16 %v1594, %v1593
    %v1622 = vpack.c.b16 %v1596, %v1595
    %v1623 = vpack.c.b16 %v1598, %v1597
    %v1624 = vpack.c.b16 %v1600, %v1599
    %1649 = vmatprep.subr.bf16.mxu0 0
    %1650 = vmatpush1.bf16.msra.mxu0 %v1601
    %1651 = vmatprep.subr.bf16.mxu0 0
    %1652 = vmatpush1.bf16.msra.mxu0 %v1602
    %1653 = vmatprep.subr.bf16.mxu0 0
    %1654 = vmatpush1.bf16.msra.mxu0 %v1603
    %1655 = vmatprep.subr.bf16.mxu0 0
    %1656 = vmatpush1.bf16.msra.mxu0 %v1604
    %1657 = vmatprep.subr.bf16.mxu0 0
    %1658 = vmatpush1.bf16.msra.mxu0 %v1605
    %1659 = vmatprep.subr.bf16.mxu0 0
    %1660 = vmatpush1.bf16.msra.mxu0 %v1606
    %1661 = vmatprep.subr.bf16.mxu0 0
    %1662 = vmatpush1.bf16.msra.mxu0 %v1607
    %1663 = vmatprep.subr.bf16.mxu0 0
    %1664 = vmatpush1.bf16.msra.mxu0 %v1608
    %1665 = vmatprep.subr.bf16.mxu0 0
    %1666 = vmatpush1.bf16.msra.mxu0 %v1609
    %1667 = vmatprep.subr.bf16.mxu0 0
    %1668 = vmatpush1.bf16.msra.mxu0 %v1610
    %1669 = vmatprep.subr.bf16.mxu0 0
    %1670 = vmatpush1.bf16.msra.mxu0 %v1611
    %1671 = vmatprep.subr.bf16.mxu0 0
    %1672 = vmatpush1.bf16.msra.mxu0 %v1612
    %1673 = vmatprep.subr.bf16.mxu0 0
    %1674 = vmatpush1.bf16.msra.mxu0 %v1613
    %1675 = vmatprep.subr.bf16.mxu0 0
    %1676 = vmatpush1.bf16.msra.mxu0 %v1614
    %1677 = vmatprep.subr.bf16.mxu0 0
    %1678 = vmatpush1.bf16.msra.mxu0 %v1615
    %1679 = vmatprep.subr.bf16.mxu0 0
    %1680 = vmatpush1.bf16.msra.mxu0 %v1616
    %1681 = vmatprep.mubr.bf16.mxu0 %v1448
    %1682 = vmatmul.mubr.bf16.gmra.mrb[0].mxu0 %v1447
    %v1683 = vpop.f32.mrb[0].mxu0
    %v1684 = vadd.f32 %v1503, %v1683
    %v1685 = vpop.f32.mrb[0].mxu0
    %v1686 = vpop.f32.mrb[0].mxu0
    %v1687 = vadd.f32 %v1503, %v1686
    %v1688 = vpop.f32.mrb[0].mxu0
    %1689 = vdwg.mxu0
    %1690 = vmatprep.subr.bf16.mxu0 0
    %1691 = vmatpush1.bf16.msra.mxu0 %v1617
    %1692 = vmatprep.subr.bf16.mxu0 0
    %1693 = vmatpush1.bf16.msra.mxu0 %v1618
    %1694 = vmatprep.subr.bf16.mxu0 0
    %1695 = vmatpush1.bf16.msra.mxu0 %v1619
    %1696 = vmatprep.subr.bf16.mxu0 0
    %1697 = vmatpush1.bf16.msra.mxu0 %v1620
    %1698 = vmatprep.subr.bf16.mxu0 0
    %1699 = vmatpush1.bf16.msra.mxu0 %v1621
    %1700 = vmatprep.subr.bf16.mxu0 0
    %1701 = vmatpush1.bf16.msra.mxu0 %v1622
    %1702 = vmatprep.subr.bf16.mxu0 0
    %1703 = vmatpush1.bf16.msra.mxu0 %v1623
    %1704 = vmatprep.subr.bf16.mxu0 0
    %1705 = vmatpush1.bf16.msra.mxu0 %v1624
    %1706 = vmatprep.subr.bf16.mxu0 0
    %1707 = vmatpush1.bf16.msra.mxu0 0
    %1708 = vmatprep.subr.bf16.mxu0 0
    %1709 = vmatpush1.bf16.msra.mxu0 0
    %1710 = vmatprep.subr.bf16.mxu0 0
    %1711 = vmatpush1.bf16.msra.mxu0 0
    %1712 = vmatprep.subr.bf16.mxu0 0
    %1713 = vmatpush1.bf16.msra.mxu0 0
    %1714 = vmatprep.subr.bf16.mxu0 0
    %1715 = vmatpush1.bf16.msra.mxu0 0
    %1716 = vmatprep.subr.bf16.mxu0 0
    %1717 = vmatpush1.bf16.msra.mxu0 0
    %1718 = vmatprep.subr.bf16.mxu0 0
    %1719 = vmatpush1.bf16.msra.mxu0 0
    %1720 = vmatprep.subr.bf16.mxu0 0
    %1721 = vmatpush1.bf16.msra.mxu0 0
    %1722 = vmatprep.mubr.bf16.mxu0 0
    %1723 = vmatmul.mubr.bf16.gmra.mrb[0].mxu0 %v1449
    %v1724 = vpop.f32.mrb[0].mxu0
    %v1725 = vadd.f32 %v1684, %v1724
    %v1726 = vpop.f32.mrb[0].mxu0
    %v1727 = vpop.f32.mrb[0].mxu0
    %v1728 = vadd.f32 %v1687, %v1727
    %v1729 = vpop.f32.mrb[0].mxu0
    %1730 = vdwg.mxu0
    %v1731 = vmax.f32 %v1725, 0.0
    %v1732 = vmax.f32 %v1728, 0.0
    %v1733 = vpack.c.bf16 %v1732, %v1731
    %v1734 = vld [vmem:[#allocation8] sm:$0xf]
    %v1735 = vld [vmem:[#allocation8 + $0x4] sm:$0xf]
    %v1736 = vld [vmem:[#allocation8 + $0x8] sm:$0xf]
    %v1737 = vld [vmem:[#allocation8 + $0xc] sm:$0xf]
    %v1738 = vld [vmem:[#allocation8 + $0x10] sm:$0xf]
    %v1739 = vld [vmem:[#allocation8 + $0x14] sm:$0xf]
    %v1740 = vld [vmem:[#allocation8 + $0x18] sm:$0xf]
    %v1741 = vld [vmem:[#allocation8 + $0x1c] sm:$0xf]
    %v1742 = vld [vmem:[#allocation8 + $0x20] sm:$0xf]
    %v1743 = vld [vmem:[#allocation8 + $0x24] sm:$0xf]
    %v1744 = vld [vmem:[#allocation8 + $0x28] sm:$0xf]
    %v1745 = vld [vmem:[#allocation8 + $0x2c] sm:$0xf]
    %v1746 = vld [vmem:[#allocation8 + $0x30] sm:$0xf]
    %v1747 = vld [vmem:[#allocation8 + $0x34] sm:$0xf]
    %v1748 = vld [vmem:[#allocation8 + $0x38] sm:$0xf]
    %v1749 = vld [vmem:[#allocation8 + $0x3c] sm:$0xf]
    %v1750 = vld [vmem:[%s6] sm:$0x1]
    %v1752 = vlaneseq
    %v1753 = vshrl.u32 %v1752, 7
    %v1754 = vsub.s32 0, %v1753
    %v1755 = vrot.slane %v1750, %v1754
    %v1773 = vunpack.c.l.b16 %v1734
    %v1774 = vunpack.c.l.b16 %v1735
    %v1775 = vunpack.c.l.b16 %v1736
    %v1776 = vunpack.c.l.b16 %v1737
    %v1777 = vunpack.c.l.b16 %v1738
    %v1778 = vunpack.c.l.b16 %v1739
    %v1779 = vunpack.c.l.b16 %v1740
    %v1780 = vunpack.c.l.b16 %v1741
    %v1781 = vunpack.c.l.b16 %v1742
    %v1782 = vunpack.c.l.b16 %v1743
    %v1783 = vunpack.c.l.b16 %v1744
    %v1784 = vunpack.c.l.b16 %v1745
    %v1785 = vunpack.c.l.b16 %v1746
    %v1786 = vunpack.c.l.b16 %v1747
    %v1787 = vunpack.c.l.b16 %v1748
    %v1788 = vunpack.c.l.b16 %v1749
    %v1789 = vpack.c.b16 %v1774, %v1773
    %v1790 = vpack.c.b16 %v1776, %v1775
    %v1791 = vpack.c.b16 %v1778, %v1777
    %v1792 = vpack.c.b16 %v1780, %v1779
    %v1793 = vpack.c.b16 %v1782, %v1781
    %v1794 = vpack.c.b16 %v1784, %v1783
    %v1795 = vpack.c.b16 %v1786, %v1785
    %v1796 = vpack.c.b16 %v1788, %v1787
    %1805 = vmatprep.subr.bf16.mxu0 0
    %1806 = vmatpush1.bf16.msra.mxu0 %v1789
    %1807 = vmatprep.subr.bf16.mxu0 0
    %1808 = vmatpush1.bf16.msra.mxu0 %v1790
    %1809 = vmatprep.subr.bf16.mxu0 0
    %1810 = vmatpush1.bf16.msra.mxu0 %v1791
    %1811 = vmatprep.subr.bf16.mxu0 0
    %1812 = vmatpush1.bf16.msra.mxu0 %v1792
    %1813 = vmatprep.subr.bf16.mxu0 0
    %1814 = vmatpush1.bf16.msra.mxu0 %v1793
    %1815 = vmatprep.subr.bf16.mxu0 0
    %1816 = vmatpush1.bf16.msra.mxu0 %v1794
    %1817 = vmatprep.subr.bf16.mxu0 0
    %1818 = vmatpush1.bf16.msra.mxu0 %v1795
    %1819 = vmatprep.subr.bf16.mxu0 0
    %1820 = vmatpush1.bf16.msra.mxu0 %v1796
    %1821 = vmatprep.subr.bf16.mxu0 0
    %1822 = vmatpush1.bf16.msra.mxu0 0
    %1823 = vmatprep.subr.bf16.mxu0 0
    %1824 = vmatpush1.bf16.msra.mxu0 0
    %1825 = vmatprep.subr.bf16.mxu0 0
    %1826 = vmatpush1.bf16.msra.mxu0 0
    %1827 = vmatprep.subr.bf16.mxu0 0
    %1828 = vmatpush1.bf16.msra.mxu0 0
    %1829 = vmatprep.subr.bf16.mxu0 0
    %1830 = vmatpush1.bf16.msra.mxu0 0
    %1831 = vmatprep.subr.bf16.mxu0 0
    %1832 = vmatpush1.bf16.msra.mxu0 0
    %1833 = vmatprep.subr.bf16.mxu0 0
    %1834 = vmatpush1.bf16.msra.mxu0 0
    %1835 = vmatprep.subr.bf16.mxu0 0
    %1836 = vmatpush1.bf16.msra.mxu0 0
    %1837 = vmatprep.mubr.bf16.mxu0 0
    %1838 = vmatmul.mubr.bf16.gmra.mrb[0].mxu0 %v1733
    %v1839 = vpop.f32.mrb[0].mxu0
    %v1840 = vadd.f32 %v1755, %v1839
    %v1841 = vpop.f32.mrb[0].mxu0
    %v1842 = vpop.f32.mrb[0].mxu0
    %v1843 = vadd.f32 %v1755, %v1842
    %v1844 = vpop.f32.mrb[0].mxu0
    %1845 = vdwg.mxu0
    %1846 = vst [vmem:[#allocation10] sm:$0xff] %v1840
    %1847 = vst [vmem:[#allocation10 + $0x8] sm:$0xff] %v1843
    // Predicated region
    $region46: #{_forward_padded.1} parent=1 // pred_check
      _
    $region47: #{_forward_padded.1} parent=1 // pred_check_branch
      %1849 = sbr.rel (0) target = $region49
    $region48: #{_forward_padded.1} parent=1 // pred_region
      %s1851 = ssub.s32 256, 256
      %1852 = vsyncadd [#allocation4], %s1851
      %s1853 = sshll.u32 [#allocation10], 4
      %s1854 = int_to_ptr.vmem [resolvable:$true] %s1853
      %1859 = dma.vmem_to_hbm [thread:$0]  %s1854, 256, %s7, [#allocation4], 128, 128, 8
    $region49: #{_forward_padded.1} parent=1 // pred_fallthru
      _
    // Predicated region
    $region50: #{_forward_padded.1} parent=1 // pred_check
      _
    $region51: #{_forward_padded.1} parent=1 // pred_check_branch
      %1861 = sbr.rel (0) target = $region53
    $region52: #{_forward_padded.1} parent=1 // pred_region
      %1862 = dma.done [#allocation4], 256
    $region53: #{_forward_padded.1} parent=1 // pred_fallthru
      _
    %1863 = vsyncpa [#allocation3], 1
    %1864 = vsyncpa [#allocation6], 1
    %1865 = vsyncpa [#allocation9], 1
    %1866 = vsyncpa [#allocation4], 1

</llo_original>
